<compile_context>
chip_gen: v6e
topology: v6e:2x2x1
jax: 0.10.0
libtpu: 0.0.40
codegen_flags: <defaults>
</compile_context>

<pallas_src>
import functools

import jax
import jax.numpy as jnp
from jax import lax
from jax.experimental import pallas as pl
from jax.experimental.pallas import tpu as pltpu

# ---- small-config "BERT" hyperparameters ----
B, S = 2, 8            # batch, sequence length
VOCAB = 100
H = 32                 # hidden size
NH = 2                 # num attention heads
DH = H // NH           # head dim
INTER = 64             # FFN intermediate size
LAYERS = 2
OUT = 1                # regression output size
LN_EPS = 1e-12         # BERT LayerNorm eps


def _layernorm(x, g, b, eps=LN_EPS):
    mu = jnp.mean(x, axis=-1, keepdims=True)
    var = jnp.mean(jnp.square(x - mu), axis=-1, keepdims=True)
    return (x - mu) * lax.rsqrt(var + eps) * g + b


# ------------------------- fused Pallas kernel -------------------------

def bert_fused_kernel(emb_ref, mb_ref, emb_ln_ref,
                      wqkv_ref, bqkv_ref, wo_ref, bo_ref, ln1_ref,
                      w1_ref, b1_ref, w2_ref, b2_ref, ln2_ref,
                      hw_ref, hb_ref, o_ref,
                      *, num_layers, num_heads, head_dim, hidden):
    f32 = jnp.float32
    bf16 = jnp.bfloat16

    # --- embedding LayerNorm ---
    x = emb_ref[...].astype(f32)                                    # [B*S, H]
    x = _layernorm(x, emb_ln_ref[0:1, :], emb_ln_ref[1:2, :])

    # block-diagonal (per-sample) + key-padding additive mask bias   [B*S, B*S]
    mb = mb_ref[...]

    def layer(l, x):
        # per-layer weight slabs (stored bf16 -> MXU-ready, no in-kernel casts)
        wqkv_l = wqkv_ref[l]                                        # [H, 3H] bf16
        wo_l = wo_ref[l]                                            # [H, H]  bf16
        w1_l = w1_ref[l]                                            # [H, I]  bf16
        w2_l = w2_ref[l]                                            # [I, H]  bf16

        # --- fused QKV projection: one [B*S, H] @ [H, 3H] MXU push ---
        xb = x.astype(bf16)
        qkv = jnp.dot(xb, wqkv_l, preferred_element_type=f32) + bqkv_ref[l]

        # --- per-head attention; output projection accumulated per head ---
        attn = jnp.zeros_like(x)                                    # f32 accumulator
        for h in range(num_heads):
            lo = h * head_dim
            qh = qkv[:, lo:lo + head_dim].astype(bf16)
            kh = qkv[:, hidden + lo:hidden + lo + head_dim].astype(bf16)
            vh = qkv[:, 2 * hidden + lo:2 * hidden + lo + head_dim].astype(bf16)
            # Q already carries 1/sqrt(head_dim) (folded into wqkv at init);
            # contract dim 1 of both operands -> no XLU transpose of K.
            s = lax.dot_general(qh, kh, (((1,), (1,)), ((), ())),
                                preferred_element_type=f32) + mb    # [B*S, B*S]
            s = s - jnp.max(s, axis=-1, keepdims=True)
            p = jnp.exp(s)
            p = p * pl.reciprocal(jnp.sum(p, axis=-1, keepdims=True), approx=True)
            ctx_h = jnp.dot(p.astype(bf16), vh,
                            preferred_element_type=f32)             # [B*S, dh]
            # accumulate through Wo's per-head input slab (no lane-offset concat)
            attn = attn + jnp.dot(ctx_h.astype(bf16),
                                  wo_l[lo:lo + head_dim, :],
                                  preferred_element_type=f32)       # [B*S, H]
        attn = attn + bo_ref[l]

        # --- residual + LayerNorm ---
        ln1 = ln1_ref[l]
        h1 = _layernorm(attn + x, ln1[0:1, :], ln1[1:2, :])

        # --- FFN + residual + LayerNorm ---
        inter = jnp.dot(h1.astype(bf16), w1_l,
                        preferred_element_type=f32) + b1_ref[l]     # [B*S, I]
        # TODO(synk): BERT uses exact erf-GELU; tanh approximation used for TPU lowering.
        inter = jax.nn.gelu(inter, approximate=True)
        ffn = jnp.dot(inter.astype(bf16), w2_l,
                      preferred_element_type=f32) + b2_ref[l]
        ln2 = ln2_ref[l]
        return _layernorm(ffn + h1, ln2[0:1, :], ln2[1:2, :])

    x = lax.fori_loop(0, num_layers, layer, x, unroll=True)

    # --- regression head on ALL rows (cheap on MXU); CLS rows picked in wrapper ---
    preds = jnp.dot(x.astype(bf16), hw_ref[...],
                    preferred_element_type=f32) + hb_ref[...]       # [B*S, OUT]
    o_ref[...] = preds.astype(o_ref.dtype)


def bert_fused_pallas(emb, mask_bias, p):
    kernel = functools.partial(
        bert_fused_kernel, num_layers=LAYERS, num_heads=NH, head_dim=DH, hidden=H)
    vmem = pl.BlockSpec(memory_space=pltpu.MemorySpace.VMEM)
    return pl.pallas_call(
        kernel,
        in_specs=[vmem] * 15,
        out_specs=vmem,
        out_shape=jax.ShapeDtypeStruct((B * S, OUT), jnp.float32),
        compiler_params=pltpu.CompilerParams(vmem_limit_bytes=4 * 1024 * 1024),
    )(emb, mask_bias, p['emb_ln'],
      p['wqkv'], p['bqkv'], p['wo'], p['bo'], p['ln1'],
      p['w1'], p['b1'], p['w2'], p['b2'], p['ln2'],
      p['head_w'], p['head_b'])


# ------------------------- full forward -------------------------

def bert_regression_forward(params, input_ids, attention_mask):
    Bn, Sn = input_ids.shape
    # --- embeddings (data-dependent gather stays in JAX glue) ---
    we = params['word_emb'][input_ids]                       # [B, S, H]
    pe = params['pos_emb'][jnp.arange(Sn)]                   # [S, H]
    te = params['type_emb'][0]                               # [H]
    emb = (we + pe[None, :, :] + te[None, None, :]).reshape(Bn * Sn, H)

    # Block-diagonal (same-sample) + key-padding additive bias, BERT-style -10000.
    sample = jnp.arange(Bn * Sn) // Sn
    same_sample = sample[:, None] == sample[None, :]
    key_valid = attention_mask.reshape(-1) > 0
    mask_bias = jnp.where(same_sample & key_valid[None, :], 0.0, -10000.0)
    mask_bias = mask_bias.astype(jnp.float32)                # [B*S, B*S]

    preds_all = bert_fused_pallas(emb, mask_bias, params)    # [B*S, OUT]
    return preds_all.reshape(Bn, Sn, OUT)[:, 0, :]           # CLS rows -> [B, OUT]


def init_params(key):
    ks = jax.random.split(key, 4 + LAYERS)

    def w(k, shape):
        return jax.random.normal(k, shape, jnp.float32) * 0.02

    scale = 1.0 / (DH ** 0.5)
    wqkv, wo, w1, w2 = [], [], [], []
    for l in range(LAYERS):
        lk = jax.random.split(ks[4 + l], 6)
        # 1/sqrt(head_dim) folded into the Q block (Q bias is zero -> no bias scaling).
        wqkv.append(jnp.concatenate(
            [w(lk[0], (H, H)) * scale, w(lk[1], (H, H)), w(lk[2], (H, H))], axis=1))
        wo.append(w(lk[3], (H, H)))
        w1.append(w(lk[4], (H, INTER)))
        w2.append(w(lk[5], (INTER, H)))

    ln_init = jnp.stack([jnp.ones((H,), jnp.float32),
                         jnp.zeros((H,), jnp.float32)])       # [2, H] (gamma; beta)

    params = {
        'word_emb': w(ks[0], (VOCAB, H)),
        'pos_emb': w(ks[1], (S, H)),
        'type_emb': w(ks[2], (2, H)),
        'emb_ln': ln_init,                                           # [2, H]
        'wqkv': jnp.stack(wqkv).astype(jnp.bfloat16),                # [L, H, 3H] bf16
        'bqkv': jnp.zeros((LAYERS, 1, 3 * H), jnp.float32),
        'wo': jnp.stack(wo).astype(jnp.bfloat16),                    # [L, H, H]  bf16
        'bo': jnp.zeros((LAYERS, 1, H), jnp.float32),
        'ln1': jnp.tile(ln_init[None], (LAYERS, 1, 1)),              # [L, 2, H]
        'w1': jnp.stack(w1).astype(jnp.bfloat16),                    # [L, H, I]  bf16
        'b1': jnp.zeros((LAYERS, 1, INTER), jnp.float32),
        'w2': jnp.stack(w2).astype(jnp.bfloat16),                    # [L, I, H]  bf16
        'b2': jnp.zeros((LAYERS, 1, H), jnp.float32),
        'ln2': jnp.tile(ln_init[None], (LAYERS, 1, 1)),              # [L, 2, H]
        'head_w': w(ks[3], (H, OUT)).astype(jnp.bfloat16),           # [H, OUT]   bf16
        'head_b': jnp.zeros((1, OUT), jnp.float32),
    }
    return params


if __name__ == "__main__":
    key = jax.random.PRNGKey(0)
    k_params, k_ids = jax.random.split(key)

    params = init_params(k_params)
    input_ids = jax.random.randint(k_ids, (B, S), 0, VOCAB, dtype=jnp.int32)
    # sample 0 fully attended, sample 1 has last two tokens masked (padding)
    attention_mask = jnp.array([[1] * S, [1] * (S - 2) + [0] * 2], dtype=jnp.int32)

    fwd = jax.jit(bert_regression_forward)
    preds = fwd(params, input_ids, attention_mask)
    jax.block_until_ready(preds)

    assert preds.shape == (B, OUT) and preds.dtype == jnp.float32
    assert bool(jnp.all(jnp.isfinite(preds)))
    print("KERNEL_OK")
</pallas_src>

<mosaic_0001>
module attributes {stable_mosaic.version = 11 : i64} {
  func.func @bert_fused_kernel(%arg0: memref<16x32xf32, #tpu.memory_space<vmem>>, %arg1: memref<16x16xf32, #tpu.memory_space<vmem>>, %arg2: memref<2x32xf32, #tpu.memory_space<vmem>>, %arg3: memref<2x32x96xbf16, #tpu.memory_space<vmem>>, %arg4: memref<2x1x96xf32, #tpu.memory_space<vmem>>, %arg5: memref<2x32x32xbf16, #tpu.memory_space<vmem>>, %arg6: memref<2x1x32xf32, #tpu.memory_space<vmem>>, %arg7: memref<2x2x32xf32, #tpu.memory_space<vmem>>, %arg8: memref<2x32x64xbf16, #tpu.memory_space<vmem>>, %arg9: memref<2x1x64xf32, #tpu.memory_space<vmem>>, %arg10: memref<2x64x32xbf16, #tpu.memory_space<vmem>>, %arg11: memref<2x1x32xf32, #tpu.memory_space<vmem>>, %arg12: memref<2x2x32xf32, #tpu.memory_space<vmem>>, %arg13: memref<32x1xbf16, #tpu.memory_space<vmem>>, %arg14: memref<1x1xf32, #tpu.memory_space<vmem>>, %arg15: memref<16x1xf32, #tpu.memory_space<vmem>>) attributes {dimension_semantics = [], scalar_prefetch = 0 : i64, scratch_operands = 0 : i64, tpu.core_type = #tpu.core_type<tc>} {
    %c0 = arith.constant 0 : index
    %c0_0 = arith.constant 0 : index
    %0 = vector.load %arg0[%c0, %c0_0] : memref<16x32xf32, #tpu.memory_space<vmem>>, vector<16x32xf32>
    %c0_1 = arith.constant 0 : index
    %c0_2 = arith.constant 0 : index
    %1 = vector.load %arg2[%c0_1, %c0_2] : memref<2x32xf32, #tpu.memory_space<vmem>>, vector<1x32xf32>
    %c1 = arith.constant 1 : index
    %c0_3 = arith.constant 0 : index
    %2 = vector.load %arg2[%c1, %c0_3] : memref<2x32xf32, #tpu.memory_space<vmem>>, vector<1x32xf32>
    %cst = arith.constant dense<0.000000e+00> : vector<16xf32>
    %3 = vector.multi_reduction <add>, %0, %cst [1] : vector<16x32xf32> to vector<16xf32>
    %4 = vector.shape_cast %3 : vector<16xf32> to vector<16x1xf32>
    %cst_4 = arith.constant 3.200000e+01 : f32
    %5 = vector.broadcast %cst_4 : f32 to vector<16x1xf32>
    %6 = arith.divf %4, %5 : vector<16x1xf32>
    %7 = vector.broadcast %6 : vector<16x1xf32> to vector<16x32xf32>
    %8 = arith.subf %0, %7 : vector<16x32xf32>
    %9 = arith.mulf %8, %8 : vector<16x32xf32>
    %cst_5 = arith.constant dense<0.000000e+00> : vector<16xf32>
    %10 = vector.multi_reduction <add>, %9, %cst_5 [1] : vector<16x32xf32> to vector<16xf32>
    %11 = vector.shape_cast %10 : vector<16xf32> to vector<16x1xf32>
    %cst_6 = arith.constant 3.200000e+01 : f32
    %12 = vector.broadcast %cst_6 : f32 to vector<16x1xf32>
    %13 = arith.divf %11, %12 : vector<16x1xf32>
    %14 = vector.broadcast %6 : vector<16x1xf32> to vector<16x32xf32>
    %15 = arith.subf %0, %14 : vector<16x32xf32>
    %cst_7 = arith.constant 9.99999996E-13 : f32
    %16 = vector.broadcast %cst_7 : f32 to vector<16x1xf32>
    %17 = arith.addf %13, %16 : vector<16x1xf32>
    %18 = math.rsqrt %17 : vector<16x1xf32>
    %19 = vector.broadcast %18 : vector<16x1xf32> to vector<16x32xf32>
    %20 = arith.mulf %15, %19 : vector<16x32xf32>
    %21 = vector.broadcast %1 : vector<1x32xf32> to vector<16x32xf32>
    %22 = arith.mulf %20, %21 : vector<16x32xf32>
    %23 = vector.broadcast %2 : vector<1x32xf32> to vector<16x32xf32>
    %24 = arith.addf %22, %23 : vector<16x32xf32>
    %c0_8 = arith.constant 0 : index
    %c0_9 = arith.constant 0 : index
    %25 = vector.load %arg1[%c0_8, %c0_9] : memref<16x16xf32, #tpu.memory_space<vmem>>, vector<16x16xf32>
    %c0_i32 = arith.constant 0 : i32
    %26 = arith.index_cast %c0_i32 : i32 to index
    %c0_10 = arith.constant 0 : index
    %c0_11 = arith.constant 0 : index
    %27 = vector.load %arg3[%26, %c0_10, %c0_11] : memref<2x32x96xbf16, #tpu.memory_space<vmem>>, vector<1x32x96xbf16>
    %28 = vector.shape_cast %27 : vector<1x32x96xbf16> to vector<32x96xbf16>
    %29 = arith.index_cast %c0_i32 : i32 to index
    %c0_12 = arith.constant 0 : index
    %c0_13 = arith.constant 0 : index
    %30 = vector.load %arg5[%29, %c0_12, %c0_13] : memref<2x32x32xbf16, #tpu.memory_space<vmem>>, vector<1x32x32xbf16>
    %31 = vector.shape_cast %30 : vector<1x32x32xbf16> to vector<32x32xbf16>
    %32 = arith.index_cast %c0_i32 : i32 to index
    %c0_14 = arith.constant 0 : index
    %c0_15 = arith.constant 0 : index
    %33 = vector.load %arg8[%32, %c0_14, %c0_15] : memref<2x32x64xbf16, #tpu.memory_space<vmem>>, vector<1x32x64xbf16>
    %34 = vector.shape_cast %33 : vector<1x32x64xbf16> to vector<32x64xbf16>
    %35 = arith.index_cast %c0_i32 : i32 to index
    %c0_16 = arith.constant 0 : index
    %c0_17 = arith.constant 0 : index
    %36 = vector.load %arg10[%35, %c0_16, %c0_17] : memref<2x64x32xbf16, #tpu.memory_space<vmem>>, vector<1x64x32xbf16>
    %37 = vector.shape_cast %36 : vector<1x64x32xbf16> to vector<64x32xbf16>
    %38 = arith.truncf %24 : vector<16x32xf32> to vector<16x32xbf16>
    %cst_18 = arith.constant dense<0.000000e+00> : vector<16x96xf32>
    %39 = tpu.matmul %38, %28, %cst_18 {dimension_numbers = #tpu.dot_dimension_numbers<[1], [0], [0], [1], [0, 0, 1, 1], [], []>} : vector<16x32xbf16>, vector<32x96xbf16>, vector<16x96xf32> -> vector<16x96xf32>
    %40 = arith.index_cast %c0_i32 : i32 to index
    %c0_19 = arith.constant 0 : index
    %c0_20 = arith.constant 0 : index
    %41 = vector.load %arg4[%40, %c0_19, %c0_20] : memref<2x1x96xf32, #tpu.memory_space<vmem>>, vector<1x1x96xf32>
    %42 = vector.shape_cast %41 : vector<1x1x96xf32> to vector<1x96xf32>
    %43 = vector.broadcast %42 : vector<1x96xf32> to vector<16x96xf32>
    %44 = arith.addf %39, %43 : vector<16x96xf32>
    %cst_21 = arith.constant 0.000000e+00 : f32
    %45 = vector.broadcast %cst_21 : f32 to vector<16x32xf32>
    %46 = vector.extract_strided_slice %44 {offsets = [0, 0], sizes = [16, 16], strides = [1, 1]} : vector<16x96xf32> to vector<16x16xf32>
    %47 = arith.truncf %46 : vector<16x16xf32> to vector<16x16xbf16>
    %48 = vector.extract_strided_slice %44 {offsets = [0, 32], sizes = [16, 16], strides = [1, 1]} : vector<16x96xf32> to vector<16x16xf32>
    %49 = arith.truncf %48 : vector<16x16xf32> to vector<16x16xbf16>
    %50 = vector.extract_strided_slice %44 {offsets = [0, 64], sizes = [16, 16], strides = [1, 1]} : vector<16x96xf32> to vector<16x16xf32>
    %51 = arith.truncf %50 : vector<16x16xf32> to vector<16x16xbf16>
    %cst_22 = arith.constant dense<0.000000e+00> : vector<16x16xf32>
    %52 = tpu.matmul %47, %49, %cst_22 {dimension_numbers = #tpu.dot_dimension_numbers<[1], [1], [0], [0], [0, 0, 1, 0], [], []>} : vector<16x16xbf16>, vector<16x16xbf16>, vector<16x16xf32> -> vector<16x16xf32>
    %53 = arith.addf %52, %25 : vector<16x16xf32>
    %cst_23 = arith.constant dense<0xFF800000> : vector<16xf32>
    %54 = vector.multi_reduction <maximumf>, %53, %cst_23 [1] : vector<16x16xf32> to vector<16xf32>
    %55 = vector.shape_cast %54 : vector<16xf32> to vector<16x1xf32>
    %56 = vector.broadcast %55 : vector<16x1xf32> to vector<16x16xf32>
    %57 = arith.subf %53, %56 : vector<16x16xf32>
    %58 = math.exp %57 : vector<16x16xf32>
    %cst_24 = arith.constant dense<0.000000e+00> : vector<16xf32>
    %59 = vector.multi_reduction <add>, %58, %cst_24 [1] : vector<16x16xf32> to vector<16xf32>
    %60 = vector.shape_cast %59 : vector<16xf32> to vector<16x1xf32>
    %61 = tpu.reciprocal %60 {approx = true} : vector<16x1xf32> -> vector<16x1xf32>
    %62 = vector.broadcast %61 : vector<16x1xf32> to vector<16x16xf32>
    %63 = arith.mulf %58, %62 : vector<16x16xf32>
    %64 = arith.truncf %63 : vector<16x16xf32> to vector<16x16xbf16>
    %cst_25 = arith.constant dense<0.000000e+00> : vector<16x16xf32>
    %65 = tpu.matmul %64, %51, %cst_25 {dimension_numbers = #tpu.dot_dimension_numbers<[1], [0], [0], [1], [0, 0, 1, 1], [], []>} : vector<16x16xbf16>, vector<16x16xbf16>, vector<16x16xf32> -> vector<16x16xf32>
    %66 = arith.truncf %65 : vector<16x16xf32> to vector<16x16xbf16>
    %67 = vector.extract_strided_slice %31 {offsets = [0, 0], sizes = [16, 32], strides = [1, 1]} : vector<32x32xbf16> to vector<16x32xbf16>
    %cst_26 = arith.constant dense<0.000000e+00> : vector<16x32xf32>
    %68 = tpu.matmul %66, %67, %cst_26 {dimension_numbers = #tpu.dot_dimension_numbers<[1], [0], [0], [1], [0, 0, 1, 1], [], []>} : vector<16x16xbf16>, vector<16x32xbf16>, vector<16x32xf32> -> vector<16x32xf32>
    %69 = arith.addf %45, %68 : vector<16x32xf32>
    %70 = vector.extract_strided_slice %44 {offsets = [0, 16], sizes = [16, 16], strides = [1, 1]} : vector<16x96xf32> to vector<16x16xf32>
    %71 = arith.truncf %70 : vector<16x16xf32> to vector<16x16xbf16>
    %72 = vector.extract_strided_slice %44 {offsets = [0, 48], sizes = [16, 16], strides = [1, 1]} : vector<16x96xf32> to vector<16x16xf32>
    %73 = arith.truncf %72 : vector<16x16xf32> to vector<16x16xbf16>
    %74 = vector.extract_strided_slice %44 {offsets = [0, 80], sizes = [16, 16], strides = [1, 1]} : vector<16x96xf32> to vector<16x16xf32>
    %75 = arith.truncf %74 : vector<16x16xf32> to vector<16x16xbf16>
    %cst_27 = arith.constant dense<0.000000e+00> : vector<16x16xf32>
    %76 = tpu.matmul %71, %73, %cst_27 {dimension_numbers = #tpu.dot_dimension_numbers<[1], [1], [0], [0], [0, 0, 1, 0], [], []>} : vector<16x16xbf16>, vector<16x16xbf16>, vector<16x16xf32> -> vector<16x16xf32>
    %77 = arith.addf %76, %25 : vector<16x16xf32>
    %cst_28 = arith.constant dense<0xFF800000> : vector<16xf32>
    %78 = vector.multi_reduction <maximumf>, %77, %cst_28 [1] : vector<16x16xf32> to vector<16xf32>
    %79 = vector.shape_cast %78 : vector<16xf32> to vector<16x1xf32>
    %80 = vector.broadcast %79 : vector<16x1xf32> to vector<16x16xf32>
    %81 = arith.subf %77, %80 : vector<16x16xf32>
    %82 = math.exp %81 : vector<16x16xf32>
    %cst_29 = arith.constant dense<0.000000e+00> : vector<16xf32>
    %83 = vector.multi_reduction <add>, %82, %cst_29 [1] : vector<16x16xf32> to vector<16xf32>
    %84 = vector.shape_cast %83 : vector<16xf32> to vector<16x1xf32>
    %85 = tpu.reciprocal %84 {approx = true} : vector<16x1xf32> -> vector<16x1xf32>
    %86 = vector.broadcast %85 : vector<16x1xf32> to vector<16x16xf32>
    %87 = arith.mulf %82, %86 : vector<16x16xf32>
    %88 = arith.truncf %87 : vector<16x16xf32> to vector<16x16xbf16>
    %cst_30 = arith.constant dense<0.000000e+00> : vector<16x16xf32>
    %89 = tpu.matmul %88, %75, %cst_30 {dimension_numbers = #tpu.dot_dimension_numbers<[1], [0], [0], [1], [0, 0, 1, 1], [], []>} : vector<16x16xbf16>, vector<16x16xbf16>, vector<16x16xf32> -> vector<16x16xf32>
    %90 = arith.truncf %89 : vector<16x16xf32> to vector<16x16xbf16>
    %91 = vector.extract_strided_slice %31 {offsets = [16, 0], sizes = [16, 32], strides = [1, 1]} : vector<32x32xbf16> to vector<16x32xbf16>
    %cst_31 = arith.constant dense<0.000000e+00> : vector<16x32xf32>
    %92 = tpu.matmul %90, %91, %cst_31 {dimension_numbers = #tpu.dot_dimension_numbers<[1], [0], [0], [1], [0, 0, 1, 1], [], []>} : vector<16x16xbf16>, vector<16x32xbf16>, vector<16x32xf32> -> vector<16x32xf32>
    %93 = arith.addf %69, %92 : vector<16x32xf32>
    %94 = arith.index_cast %c0_i32 : i32 to index
    %c0_32 = arith.constant 0 : index
    %c0_33 = arith.constant 0 : index
    %95 = vector.load %arg6[%94, %c0_32, %c0_33] : memref<2x1x32xf32, #tpu.memory_space<vmem>>, vector<1x1x32xf32>
    %96 = vector.shape_cast %95 : vector<1x1x32xf32> to vector<1x32xf32>
    %97 = vector.broadcast %96 : vector<1x32xf32> to vector<16x32xf32>
    %98 = arith.addf %93, %97 : vector<16x32xf32>
    %99 = arith.index_cast %c0_i32 : i32 to index
    %c0_34 = arith.constant 0 : index
    %c0_35 = arith.constant 0 : index
    %100 = vector.load %arg7[%99, %c0_34, %c0_35] : memref<2x2x32xf32, #tpu.memory_space<vmem>>, vector<1x2x32xf32>
    %101 = vector.shape_cast %100 : vector<1x2x32xf32> to vector<2x32xf32>
    %102 = arith.addf %98, %24 : vector<16x32xf32>
    %103 = vector.extract_strided_slice %101 {offsets = [0, 0], sizes = [1, 32], strides = [1, 1]} : vector<2x32xf32> to vector<1x32xf32>
    %104 = vector.extract_strided_slice %101 {offsets = [1, 0], sizes = [1, 32], strides = [1, 1]} : vector<2x32xf32> to vector<1x32xf32>
    %cst_36 = arith.constant dense<0.000000e+00> : vector<16xf32>
    %105 = vector.multi_reduction <add>, %102, %cst_36 [1] : vector<16x32xf32> to vector<16xf32>
    %106 = vector.shape_cast %105 : vector<16xf32> to vector<16x1xf32>
    %cst_37 = arith.constant 3.200000e+01 : f32
    %107 = vector.broadcast %cst_37 : f32 to vector<16x1xf32>
    %108 = arith.divf %106, %107 : vector<16x1xf32>
    %109 = vector.broadcast %108 : vector<16x1xf32> to vector<16x32xf32>
    %110 = arith.subf %102, %109 : vector<16x32xf32>
    %111 = arith.mulf %110, %110 : vector<16x32xf32>
    %cst_38 = arith.constant dense<0.000000e+00> : vector<16xf32>
    %112 = vector.multi_reduction <add>, %111, %cst_38 [1] : vector<16x32xf32> to vector<16xf32>
    %113 = vector.shape_cast %112 : vector<16xf32> to vector<16x1xf32>
    %cst_39 = arith.constant 3.200000e+01 : f32
    %114 = vector.broadcast %cst_39 : f32 to vector<16x1xf32>
    %115 = arith.divf %113, %114 : vector<16x1xf32>
    %116 = vector.broadcast %108 : vector<16x1xf32> to vector<16x32xf32>
    %117 = arith.subf %102, %116 : vector<16x32xf32>
    %cst_40 = arith.constant 9.99999996E-13 : f32
    %118 = vector.broadcast %cst_40 : f32 to vector<16x1xf32>
    %119 = arith.addf %115, %118 : vector<16x1xf32>
    %120 = math.rsqrt %119 : vector<16x1xf32>
    %121 = vector.broadcast %120 : vector<16x1xf32> to vector<16x32xf32>
    %122 = arith.mulf %117, %121 : vector<16x32xf32>
    %123 = vector.broadcast %103 : vector<1x32xf32> to vector<16x32xf32>
    %124 = arith.mulf %122, %123 : vector<16x32xf32>
    %125 = vector.broadcast %104 : vector<1x32xf32> to vector<16x32xf32>
    %126 = arith.addf %124, %125 : vector<16x32xf32>
    %127 = arith.truncf %126 : vector<16x32xf32> to vector<16x32xbf16>
    %cst_41 = arith.constant dense<0.000000e+00> : vector<16x64xf32>
    %128 = tpu.matmul %127, %34, %cst_41 {dimension_numbers = #tpu.dot_dimension_numbers<[1], [0], [0], [1], [0, 0, 1, 1], [], []>} : vector<16x32xbf16>, vector<32x64xbf16>, vector<16x64xf32> -> vector<16x64xf32>
    %129 = arith.index_cast %c0_i32 : i32 to index
    %c0_42 = arith.constant 0 : index
    %c0_43 = arith.constant 0 : index
    %130 = vector.load %arg9[%129, %c0_42, %c0_43] : memref<2x1x64xf32, #tpu.memory_space<vmem>>, vector<1x1x64xf32>
    %131 = vector.shape_cast %130 : vector<1x1x64xf32> to vector<1x64xf32>
    %132 = vector.broadcast %131 : vector<1x64xf32> to vector<16x64xf32>
    %133 = arith.addf %128, %132 : vector<16x64xf32>
    %134 = arith.mulf %133, %133 : vector<16x64xf32>
    %135 = arith.mulf %133, %134 : vector<16x64xf32>
    %cst_44 = arith.constant 4.471500e-02 : f32
    %136 = vector.broadcast %cst_44 : f32 to vector<16x64xf32>
    %137 = arith.mulf %136, %135 : vector<16x64xf32>
    %138 = arith.addf %133, %137 : vector<16x64xf32>
    %cst_45 = arith.constant 0.797884583 : f32
    %139 = vector.broadcast %cst_45 : f32 to vector<16x64xf32>
    %140 = arith.mulf %139, %138 : vector<16x64xf32>
    %141 = math.tanh %140 : vector<16x64xf32>
    %cst_46 = arith.constant 1.000000e+00 : f32
    %142 = vector.broadcast %cst_46 : f32 to vector<16x64xf32>
    %143 = arith.addf %142, %141 : vector<16x64xf32>
    %cst_47 = arith.constant 5.000000e-01 : f32
    %144 = vector.broadcast %cst_47 : f32 to vector<16x64xf32>
    %145 = arith.mulf %144, %143 : vector<16x64xf32>
    %146 = arith.mulf %133, %145 : vector<16x64xf32>
    %147 = arith.truncf %146 : vector<16x64xf32> to vector<16x64xbf16>
    %cst_48 = arith.constant dense<0.000000e+00> : vector<16x32xf32>
    %148 = tpu.matmul %147, %37, %cst_48 {dimension_numbers = #tpu.dot_dimension_numbers<[1], [0], [0], [1], [0, 0, 1, 1], [], []>} : vector<16x64xbf16>, vector<64x32xbf16>, vector<16x32xf32> -> vector<16x32xf32>
    %149 = arith.index_cast %c0_i32 : i32 to index
    %c0_49 = arith.constant 0 : index
    %c0_50 = arith.constant 0 : index
    %150 = vector.load %arg11[%149, %c0_49, %c0_50] : memref<2x1x32xf32, #tpu.memory_space<vmem>>, vector<1x1x32xf32>
    %151 = vector.shape_cast %150 : vector<1x1x32xf32> to vector<1x32xf32>
    %152 = vector.broadcast %151 : vector<1x32xf32> to vector<16x32xf32>
    %153 = arith.addf %148, %152 : vector<16x32xf32>
    %154 = arith.index_cast %c0_i32 : i32 to index
    %c0_51 = arith.constant 0 : index
    %c0_52 = arith.constant 0 : index
    %155 = vector.load %arg12[%154, %c0_51, %c0_52] : memref<2x2x32xf32, #tpu.memory_space<vmem>>, vector<1x2x32xf32>
    %156 = vector.shape_cast %155 : vector<1x2x32xf32> to vector<2x32xf32>
    %157 = arith.addf %153, %126 : vector<16x32xf32>
    %158 = vector.extract_strided_slice %156 {offsets = [0, 0], sizes = [1, 32], strides = [1, 1]} : vector<2x32xf32> to vector<1x32xf32>
    %159 = vector.extract_strided_slice %156 {offsets = [1, 0], sizes = [1, 32], strides = [1, 1]} : vector<2x32xf32> to vector<1x32xf32>
    %cst_53 = arith.constant dense<0.000000e+00> : vector<16xf32>
    %160 = vector.multi_reduction <add>, %157, %cst_53 [1] : vector<16x32xf32> to vector<16xf32>
    %161 = vector.shape_cast %160 : vector<16xf32> to vector<16x1xf32>
    %cst_54 = arith.constant 3.200000e+01 : f32
    %162 = vector.broadcast %cst_54 : f32 to vector<16x1xf32>
    %163 = arith.divf %161, %162 : vector<16x1xf32>
    %164 = vector.broadcast %163 : vector<16x1xf32> to vector<16x32xf32>
    %165 = arith.subf %157, %164 : vector<16x32xf32>
    %166 = arith.mulf %165, %165 : vector<16x32xf32>
    %cst_55 = arith.constant dense<0.000000e+00> : vector<16xf32>
    %167 = vector.multi_reduction <add>, %166, %cst_55 [1] : vector<16x32xf32> to vector<16xf32>
    %168 = vector.shape_cast %167 : vector<16xf32> to vector<16x1xf32>
    %cst_56 = arith.constant 3.200000e+01 : f32
    %169 = vector.broadcast %cst_56 : f32 to vector<16x1xf32>
    %170 = arith.divf %168, %169 : vector<16x1xf32>
    %171 = vector.broadcast %163 : vector<16x1xf32> to vector<16x32xf32>
    %172 = arith.subf %157, %171 : vector<16x32xf32>
    %cst_57 = arith.constant 9.99999996E-13 : f32
    %173 = vector.broadcast %cst_57 : f32 to vector<16x1xf32>
    %174 = arith.addf %170, %173 : vector<16x1xf32>
    %175 = math.rsqrt %174 : vector<16x1xf32>
    %176 = vector.broadcast %175 : vector<16x1xf32> to vector<16x32xf32>
    %177 = arith.mulf %172, %176 : vector<16x32xf32>
    %178 = vector.broadcast %158 : vector<1x32xf32> to vector<16x32xf32>
    %179 = arith.mulf %177, %178 : vector<16x32xf32>
    %180 = vector.broadcast %159 : vector<1x32xf32> to vector<16x32xf32>
    %181 = arith.addf %179, %180 : vector<16x32xf32>
    %c1_i32 = arith.constant 1 : i32
    %182 = arith.index_cast %c1_i32 : i32 to index
    %c0_58 = arith.constant 0 : index
    %c0_59 = arith.constant 0 : index
    %183 = vector.load %arg3[%182, %c0_58, %c0_59] : memref<2x32x96xbf16, #tpu.memory_space<vmem>>, vector<1x32x96xbf16>
    %184 = vector.shape_cast %183 : vector<1x32x96xbf16> to vector<32x96xbf16>
    %185 = arith.index_cast %c1_i32 : i32 to index
    %c0_60 = arith.constant 0 : index
    %c0_61 = arith.constant 0 : index
    %186 = vector.load %arg5[%185, %c0_60, %c0_61] : memref<2x32x32xbf16, #tpu.memory_space<vmem>>, vector<1x32x32xbf16>
    %187 = vector.shape_cast %186 : vector<1x32x32xbf16> to vector<32x32xbf16>
    %188 = arith.index_cast %c1_i32 : i32 to index
    %c0_62 = arith.constant 0 : index
    %c0_63 = arith.constant 0 : index
    %189 = vector.load %arg8[%188, %c0_62, %c0_63] : memref<2x32x64xbf16, #tpu.memory_space<vmem>>, vector<1x32x64xbf16>
    %190 = vector.shape_cast %189 : vector<1x32x64xbf16> to vector<32x64xbf16>
    %191 = arith.index_cast %c1_i32 : i32 to index
    %c0_64 = arith.constant 0 : index
    %c0_65 = arith.constant 0 : index
    %192 = vector.load %arg10[%191, %c0_64, %c0_65] : memref<2x64x32xbf16, #tpu.memory_space<vmem>>, vector<1x64x32xbf16>
    %193 = vector.shape_cast %192 : vector<1x64x32xbf16> to vector<64x32xbf16>
    %194 = arith.truncf %181 : vector<16x32xf32> to vector<16x32xbf16>
    %cst_66 = arith.constant dense<0.000000e+00> : vector<16x96xf32>
    %195 = tpu.matmul %194, %184, %cst_66 {dimension_numbers = #tpu.dot_dimension_numbers<[1], [0], [0], [1], [0, 0, 1, 1], [], []>} : vector<16x32xbf16>, vector<32x96xbf16>, vector<16x96xf32> -> vector<16x96xf32>
    %196 = arith.index_cast %c1_i32 : i32 to index
    %c0_67 = arith.constant 0 : index
    %c0_68 = arith.constant 0 : index
    %197 = vector.load %arg4[%196, %c0_67, %c0_68] : memref<2x1x96xf32, #tpu.memory_space<vmem>>, vector<1x1x96xf32>
    %198 = vector.shape_cast %197 : vector<1x1x96xf32> to vector<1x96xf32>
    %199 = vector.broadcast %198 : vector<1x96xf32> to vector<16x96xf32>
    %200 = arith.addf %195, %199 : vector<16x96xf32>
    %cst_69 = arith.constant 0.000000e+00 : f32
    %201 = vector.broadcast %cst_69 : f32 to vector<16x32xf32>
    %202 = vector.extract_strided_slice %200 {offsets = [0, 0], sizes = [16, 16], strides = [1, 1]} : vector<16x96xf32> to vector<16x16xf32>
    %203 = arith.truncf %202 : vector<16x16xf32> to vector<16x16xbf16>
    %204 = vector.extract_strided_slice %200 {offsets = [0, 32], sizes = [16, 16], strides = [1, 1]} : vector<16x96xf32> to vector<16x16xf32>
    %205 = arith.truncf %204 : vector<16x16xf32> to vector<16x16xbf16>
    %206 = vector.extract_strided_slice %200 {offsets = [0, 64], sizes = [16, 16], strides = [1, 1]} : vector<16x96xf32> to vector<16x16xf32>
    %207 = arith.truncf %206 : vector<16x16xf32> to vector<16x16xbf16>
    %cst_70 = arith.constant dense<0.000000e+00> : vector<16x16xf32>
    %208 = tpu.matmul %203, %205, %cst_70 {dimension_numbers = #tpu.dot_dimension_numbers<[1], [1], [0], [0], [0, 0, 1, 0], [], []>} : vector<16x16xbf16>, vector<16x16xbf16>, vector<16x16xf32> -> vector<16x16xf32>
    %209 = arith.addf %208, %25 : vector<16x16xf32>
    %cst_71 = arith.constant dense<0xFF800000> : vector<16xf32>
    %210 = vector.multi_reduction <maximumf>, %209, %cst_71 [1] : vector<16x16xf32> to vector<16xf32>
    %211 = vector.shape_cast %210 : vector<16xf32> to vector<16x1xf32>
    %212 = vector.broadcast %211 : vector<16x1xf32> to vector<16x16xf32>
    %213 = arith.subf %209, %212 : vector<16x16xf32>
    %214 = math.exp %213 : vector<16x16xf32>
    %cst_72 = arith.constant dense<0.000000e+00> : vector<16xf32>
    %215 = vector.multi_reduction <add>, %214, %cst_72 [1] : vector<16x16xf32> to vector<16xf32>
    %216 = vector.shape_cast %215 : vector<16xf32> to vector<16x1xf32>
    %217 = tpu.reciprocal %216 {approx = true} : vector<16x1xf32> -> vector<16x1xf32>
    %218 = vector.broadcast %217 : vector<16x1xf32> to vector<16x16xf32>
    %219 = arith.mulf %214, %218 : vector<16x16xf32>
    %220 = arith.truncf %219 : vector<16x16xf32> to vector<16x16xbf16>
    %cst_73 = arith.constant dense<0.000000e+00> : vector<16x16xf32>
    %221 = tpu.matmul %220, %207, %cst_73 {dimension_numbers = #tpu.dot_dimension_numbers<[1], [0], [0], [1], [0, 0, 1, 1], [], []>} : vector<16x16xbf16>, vector<16x16xbf16>, vector<16x16xf32> -> vector<16x16xf32>
    %222 = arith.truncf %221 : vector<16x16xf32> to vector<16x16xbf16>
    %223 = vector.extract_strided_slice %187 {offsets = [0, 0], sizes = [16, 32], strides = [1, 1]} : vector<32x32xbf16> to vector<16x32xbf16>
    %cst_74 = arith.constant dense<0.000000e+00> : vector<16x32xf32>
    %224 = tpu.matmul %222, %223, %cst_74 {dimension_numbers = #tpu.dot_dimension_numbers<[1], [0], [0], [1], [0, 0, 1, 1], [], []>} : vector<16x16xbf16>, vector<16x32xbf16>, vector<16x32xf32> -> vector<16x32xf32>
    %225 = arith.addf %201, %224 : vector<16x32xf32>
    %226 = vector.extract_strided_slice %200 {offsets = [0, 16], sizes = [16, 16], strides = [1, 1]} : vector<16x96xf32> to vector<16x16xf32>
    %227 = arith.truncf %226 : vector<16x16xf32> to vector<16x16xbf16>
    %228 = vector.extract_strided_slice %200 {offsets = [0, 48], sizes = [16, 16], strides = [1, 1]} : vector<16x96xf32> to vector<16x16xf32>
    %229 = arith.truncf %228 : vector<16x16xf32> to vector<16x16xbf16>
    %230 = vector.extract_strided_slice %200 {offsets = [0, 80], sizes = [16, 16], strides = [1, 1]} : vector<16x96xf32> to vector<16x16xf32>
    %231 = arith.truncf %230 : vector<16x16xf32> to vector<16x16xbf16>
    %cst_75 = arith.constant dense<0.000000e+00> : vector<16x16xf32>
    %232 = tpu.matmul %227, %229, %cst_75 {dimension_numbers = #tpu.dot_dimension_numbers<[1], [1], [0], [0], [0, 0, 1, 0], [], []>} : vector<16x16xbf16>, vector<16x16xbf16>, vector<16x16xf32> -> vector<16x16xf32>
    %233 = arith.addf %232, %25 : vector<16x16xf32>
    %cst_76 = arith.constant dense<0xFF800000> : vector<16xf32>
    %234 = vector.multi_reduction <maximumf>, %233, %cst_76 [1] : vector<16x16xf32> to vector<16xf32>
    %235 = vector.shape_cast %234 : vector<16xf32> to vector<16x1xf32>
    %236 = vector.broadcast %235 : vector<16x1xf32> to vector<16x16xf32>
    %237 = arith.subf %233, %236 : vector<16x16xf32>
    %238 = math.exp %237 : vector<16x16xf32>
    %cst_77 = arith.constant dense<0.000000e+00> : vector<16xf32>
    %239 = vector.multi_reduction <add>, %238, %cst_77 [1] : vector<16x16xf32> to vector<16xf32>
    %240 = vector.shape_cast %239 : vector<16xf32> to vector<16x1xf32>
    %241 = tpu.reciprocal %240 {approx = true} : vector<16x1xf32> -> vector<16x1xf32>
    %242 = vector.broadcast %241 : vector<16x1xf32> to vector<16x16xf32>
    %243 = arith.mulf %238, %242 : vector<16x16xf32>
    %244 = arith.truncf %243 : vector<16x16xf32> to vector<16x16xbf16>
    %cst_78 = arith.constant dense<0.000000e+00> : vector<16x16xf32>
    %245 = tpu.matmul %244, %231, %cst_78 {dimension_numbers = #tpu.dot_dimension_numbers<[1], [0], [0], [1], [0, 0, 1, 1], [], []>} : vector<16x16xbf16>, vector<16x16xbf16>, vector<16x16xf32> -> vector<16x16xf32>
    %246 = arith.truncf %245 : vector<16x16xf32> to vector<16x16xbf16>
    %247 = vector.extract_strided_slice %187 {offsets = [16, 0], sizes = [16, 32], strides = [1, 1]} : vector<32x32xbf16> to vector<16x32xbf16>
    %cst_79 = arith.constant dense<0.000000e+00> : vector<16x32xf32>
    %248 = tpu.matmul %246, %247, %cst_79 {dimension_numbers = #tpu.dot_dimension_numbers<[1], [0], [0], [1], [0, 0, 1, 1], [], []>} : vector<16x16xbf16>, vector<16x32xbf16>, vector<16x32xf32> -> vector<16x32xf32>
    %249 = arith.addf %225, %248 : vector<16x32xf32>
    %250 = arith.index_cast %c1_i32 : i32 to index
    %c0_80 = arith.constant 0 : index
    %c0_81 = arith.constant 0 : index
    %251 = vector.load %arg6[%250, %c0_80, %c0_81] : memref<2x1x32xf32, #tpu.memory_space<vmem>>, vector<1x1x32xf32>
    %252 = vector.shape_cast %251 : vector<1x1x32xf32> to vector<1x32xf32>
    %253 = vector.broadcast %252 : vector<1x32xf32> to vector<16x32xf32>
    %254 = arith.addf %249, %253 : vector<16x32xf32>
    %255 = arith.index_cast %c1_i32 : i32 to index
    %c0_82 = arith.constant 0 : index
    %c0_83 = arith.constant 0 : index
    %256 = vector.load %arg7[%255, %c0_82, %c0_83] : memref<2x2x32xf32, #tpu.memory_space<vmem>>, vector<1x2x32xf32>
    %257 = vector.shape_cast %256 : vector<1x2x32xf32> to vector<2x32xf32>
    %258 = arith.addf %254, %181 : vector<16x32xf32>
    %259 = vector.extract_strided_slice %257 {offsets = [0, 0], sizes = [1, 32], strides = [1, 1]} : vector<2x32xf32> to vector<1x32xf32>
    %260 = vector.extract_strided_slice %257 {offsets = [1, 0], sizes = [1, 32], strides = [1, 1]} : vector<2x32xf32> to vector<1x32xf32>
    %cst_84 = arith.constant dense<0.000000e+00> : vector<16xf32>
    %261 = vector.multi_reduction <add>, %258, %cst_84 [1] : vector<16x32xf32> to vector<16xf32>
    %262 = vector.shape_cast %261 : vector<16xf32> to vector<16x1xf32>
    %cst_85 = arith.constant 3.200000e+01 : f32
    %263 = vector.broadcast %cst_85 : f32 to vector<16x1xf32>
    %264 = arith.divf %262, %263 : vector<16x1xf32>
    %265 = vector.broadcast %264 : vector<16x1xf32> to vector<16x32xf32>
    %266 = arith.subf %258, %265 : vector<16x32xf32>
    %267 = arith.mulf %266, %266 : vector<16x32xf32>
    %cst_86 = arith.constant dense<0.000000e+00> : vector<16xf32>
    %268 = vector.multi_reduction <add>, %267, %cst_86 [1] : vector<16x32xf32> to vector<16xf32>
    %269 = vector.shape_cast %268 : vector<16xf32> to vector<16x1xf32>
    %cst_87 = arith.constant 3.200000e+01 : f32
    %270 = vector.broadcast %cst_87 : f32 to vector<16x1xf32>
    %271 = arith.divf %269, %270 : vector<16x1xf32>
    %272 = vector.broadcast %264 : vector<16x1xf32> to vector<16x32xf32>
    %273 = arith.subf %258, %272 : vector<16x32xf32>
    %cst_88 = arith.constant 9.99999996E-13 : f32
    %274 = vector.broadcast %cst_88 : f32 to vector<16x1xf32>
    %275 = arith.addf %271, %274 : vector<16x1xf32>
    %276 = math.rsqrt %275 : vector<16x1xf32>
    %277 = vector.broadcast %276 : vector<16x1xf32> to vector<16x32xf32>
    %278 = arith.mulf %273, %277 : vector<16x32xf32>
    %279 = vector.broadcast %259 : vector<1x32xf32> to vector<16x32xf32>
    %280 = arith.mulf %278, %279 : vector<16x32xf32>
    %281 = vector.broadcast %260 : vector<1x32xf32> to vector<16x32xf32>
    %282 = arith.addf %280, %281 : vector<16x32xf32>
    %283 = arith.truncf %282 : vector<16x32xf32> to vector<16x32xbf16>
    %cst_89 = arith.constant dense<0.000000e+00> : vector<16x64xf32>
    %284 = tpu.matmul %283, %190, %cst_89 {dimension_numbers = #tpu.dot_dimension_numbers<[1], [0], [0], [1], [0, 0, 1, 1], [], []>} : vector<16x32xbf16>, vector<32x64xbf16>, vector<16x64xf32> -> vector<16x64xf32>
    %285 = arith.index_cast %c1_i32 : i32 to index
    %c0_90 = arith.constant 0 : index
    %c0_91 = arith.constant 0 : index
    %286 = vector.load %arg9[%285, %c0_90, %c0_91] : memref<2x1x64xf32, #tpu.memory_space<vmem>>, vector<1x1x64xf32>
    %287 = vector.shape_cast %286 : vector<1x1x64xf32> to vector<1x64xf32>
    %288 = vector.broadcast %287 : vector<1x64xf32> to vector<16x64xf32>
    %289 = arith.addf %284, %288 : vector<16x64xf32>
    %290 = arith.mulf %289, %289 : vector<16x64xf32>
    %291 = arith.mulf %289, %290 : vector<16x64xf32>
    %cst_92 = arith.constant 4.471500e-02 : f32
    %292 = vector.broadcast %cst_92 : f32 to vector<16x64xf32>
    %293 = arith.mulf %292, %291 : vector<16x64xf32>
    %294 = arith.addf %289, %293 : vector<16x64xf32>
    %cst_93 = arith.constant 0.797884583 : f32
    %295 = vector.broadcast %cst_93 : f32 to vector<16x64xf32>
    %296 = arith.mulf %295, %294 : vector<16x64xf32>
    %297 = math.tanh %296 : vector<16x64xf32>
    %cst_94 = arith.constant 1.000000e+00 : f32
    %298 = vector.broadcast %cst_94 : f32 to vector<16x64xf32>
    %299 = arith.addf %298, %297 : vector<16x64xf32>
    %cst_95 = arith.constant 5.000000e-01 : f32
    %300 = vector.broadcast %cst_95 : f32 to vector<16x64xf32>
    %301 = arith.mulf %300, %299 : vector<16x64xf32>
    %302 = arith.mulf %289, %301 : vector<16x64xf32>
    %303 = arith.truncf %302 : vector<16x64xf32> to vector<16x64xbf16>
    %cst_96 = arith.constant dense<0.000000e+00> : vector<16x32xf32>
    %304 = tpu.matmul %303, %193, %cst_96 {dimension_numbers = #tpu.dot_dimension_numbers<[1], [0], [0], [1], [0, 0, 1, 1], [], []>} : vector<16x64xbf16>, vector<64x32xbf16>, vector<16x32xf32> -> vector<16x32xf32>
    %305 = arith.index_cast %c1_i32 : i32 to index
    %c0_97 = arith.constant 0 : index
    %c0_98 = arith.constant 0 : index
    %306 = vector.load %arg11[%305, %c0_97, %c0_98] : memref<2x1x32xf32, #tpu.memory_space<vmem>>, vector<1x1x32xf32>
    %307 = vector.shape_cast %306 : vector<1x1x32xf32> to vector<1x32xf32>
    %308 = vector.broadcast %307 : vector<1x32xf32> to vector<16x32xf32>
    %309 = arith.addf %304, %308 : vector<16x32xf32>
    %310 = arith.index_cast %c1_i32 : i32 to index
    %c0_99 = arith.constant 0 : index
    %c0_100 = arith.constant 0 : index
    %311 = vector.load %arg12[%310, %c0_99, %c0_100] : memref<2x2x32xf32, #tpu.memory_space<vmem>>, vector<1x2x32xf32>
    %312 = vector.shape_cast %311 : vector<1x2x32xf32> to vector<2x32xf32>
    %313 = arith.addf %309, %282 : vector<16x32xf32>
    %314 = vector.extract_strided_slice %312 {offsets = [0, 0], sizes = [1, 32], strides = [1, 1]} : vector<2x32xf32> to vector<1x32xf32>
    %315 = vector.extract_strided_slice %312 {offsets = [1, 0], sizes = [1, 32], strides = [1, 1]} : vector<2x32xf32> to vector<1x32xf32>
    %cst_101 = arith.constant dense<0.000000e+00> : vector<16xf32>
    %316 = vector.multi_reduction <add>, %313, %cst_101 [1] : vector<16x32xf32> to vector<16xf32>
    %317 = vector.shape_cast %316 : vector<16xf32> to vector<16x1xf32>
    %cst_102 = arith.constant 3.200000e+01 : f32
    %318 = vector.broadcast %cst_102 : f32 to vector<16x1xf32>
    %319 = arith.divf %317, %318 : vector<16x1xf32>
    %320 = vector.broadcast %319 : vector<16x1xf32> to vector<16x32xf32>
    %321 = arith.subf %313, %320 : vector<16x32xf32>
    %322 = arith.mulf %321, %321 : vector<16x32xf32>
    %cst_103 = arith.constant dense<0.000000e+00> : vector<16xf32>
    %323 = vector.multi_reduction <add>, %322, %cst_103 [1] : vector<16x32xf32> to vector<16xf32>
    %324 = vector.shape_cast %323 : vector<16xf32> to vector<16x1xf32>
    %cst_104 = arith.constant 3.200000e+01 : f32
    %325 = vector.broadcast %cst_104 : f32 to vector<16x1xf32>
    %326 = arith.divf %324, %325 : vector<16x1xf32>
    %327 = vector.broadcast %319 : vector<16x1xf32> to vector<16x32xf32>
    %328 = arith.subf %313, %327 : vector<16x32xf32>
    %cst_105 = arith.constant 9.99999996E-13 : f32
    %329 = vector.broadcast %cst_105 : f32 to vector<16x1xf32>
    %330 = arith.addf %326, %329 : vector<16x1xf32>
    %331 = math.rsqrt %330 : vector<16x1xf32>
    %332 = vector.broadcast %331 : vector<16x1xf32> to vector<16x32xf32>
    %333 = arith.mulf %328, %332 : vector<16x32xf32>
    %334 = vector.broadcast %314 : vector<1x32xf32> to vector<16x32xf32>
    %335 = arith.mulf %333, %334 : vector<16x32xf32>
    %336 = vector.broadcast %315 : vector<1x32xf32> to vector<16x32xf32>
    %337 = arith.addf %335, %336 : vector<16x32xf32>
    %c2_i32 = arith.constant 2 : i32
    %338 = arith.truncf %337 : vector<16x32xf32> to vector<16x32xbf16>
    %c0_106 = arith.constant 0 : index
    %c0_107 = arith.constant 0 : index
    %339 = vector.load %arg13[%c0_106, %c0_107] : memref<32x1xbf16, #tpu.memory_space<vmem>>, vector<32x1xbf16>
    %cst_108 = arith.constant dense<0.000000e+00> : vector<16x1xf32>
    %340 = tpu.matmul %338, %339, %cst_108 {dimension_numbers = #tpu.dot_dimension_numbers<[1], [0], [0], [1], [0, 0, 1, 1], [], []>} : vector<16x32xbf16>, vector<32x1xbf16>, vector<16x1xf32> -> vector<16x1xf32>
    %c0_109 = arith.constant 0 : index
    %c0_110 = arith.constant 0 : index
    %341 = vector.load %arg14[%c0_109, %c0_110] : memref<1x1xf32, #tpu.memory_space<vmem>>, vector<1x1xf32>
    %342 = vector.broadcast %341 : vector<1x1xf32> to vector<16x1xf32>
    %343 = arith.addf %340, %342 : vector<16x1xf32>
    %c0_111 = arith.constant 0 : index
    %c0_112 = arith.constant 0 : index
    %344 = vector.load %arg15[%c0_111, %c0_112] : memref<16x1xf32, #tpu.memory_space<vmem>>, vector<16x1xf32>
    tpu.vector_store %arg15[%c0_111, %c0_112], %343 {strides = array<i32>} : memref<16x1xf32, #tpu.memory_space<vmem>>, vector<16x1xf32>,
    return
  }
}

</mosaic_0001>

<llo_original>
// kernel: bert_regression_forward.1
$region0: #{bert_regression_forward.1}
  #allocation0 [shape = 'u32[]', space=smem, size = 0x4, offset = 0x4, fixed_abs, tag = 'smem constant byte address 0x4 - core index']
  #allocation1 [shape = 'u32[144,128]{1,0:T(1,128)}', space=vmem, size = 0x12000, scoped, tag = 'internal scratch']
  #allocation2 [shape = 'f32[1,1]{1,0:T(1,128)S(1)}', space=vmem, size = 0x200, scoped, tag = 'scoped memory for bert_regression_forward.1']
  %s0 = inlined_call_operand.vmem [shape: f32[16,32], index: 0, kind: input, shape index: {}]
  %s1 = inlined_call_operand.vmem [shape: f32[16,16], index: 1, kind: input, shape index: {}]
  %s2 = inlined_call_operand.vmem [shape: f32[2,32], index: 2, kind: input, shape index: {}]
  %s3 = inlined_call_operand.vmem [shape: bf16[2,32,96], index: 3, kind: input, shape index: {}]
  %s4 = inlined_call_operand.vmem [shape: f32[2,1,96], index: 4, kind: input, shape index: {}]
  %s5 = inlined_call_operand.vmem [shape: bf16[2,32,32], index: 5, kind: input, shape index: {}]
  %s6 = inlined_call_operand.vmem [shape: f32[2,1,32], index: 6, kind: input, shape index: {}]
  %s7 = inlined_call_operand.vmem [shape: f32[2,2,32], index: 7, kind: input, shape index: {}]
  %s8 = inlined_call_operand.vmem [shape: bf16[2,32,64], index: 8, kind: input, shape index: {}]
  %s9 = inlined_call_operand.vmem [shape: f32[2,1,64], index: 9, kind: input, shape index: {}]
  %s10 = inlined_call_operand.vmem [shape: bf16[2,64,32], index: 10, kind: input, shape index: {}]
  %s11 = inlined_call_operand.vmem [shape: f32[2,1,32], index: 11, kind: input, shape index: {}]
  %s12 = inlined_call_operand.vmem [shape: f32[2,2,32], index: 12, kind: input, shape index: {}]
  %s13 = inlined_call_operand.vmem [shape: bf16[32,1], index: 13, kind: input, shape index: {}]
  %s14 = inlined_call_operand.<no memory space> [shape: f32[1,1], index: 14, kind: input, shape index: {}]
  %s15 = inlined_call_operand.vmem [shape: f32[16,1], index: 15, kind: output, shape index: {}]
  %s16 = sld [smem:[#allocation0]]
  $region70: #{bert_regression_forward.1} parent=0
    _
  %s18 = ssub.s32 1, %s16
  %s19 = scalar_select 0, %s18, %s16
  %v20 = vstv %s14
  %21 = vst [vmem:[#allocation2] sm:$0x1] %v20
  // Predicated region
  $region2: #{bert_regression_forward.1} parent=0 // pred_check
    _
  $region3: #{bert_regression_forward.1} parent=0 // pred_check_branch
    %23 = sbr.rel (0) target = $region5
  $region4: #{bert_regression_forward.1} parent=0 // pred_region
    _
  $region5: #{bert_regression_forward.1} parent=0 // pred_fallthru
    _
  // Predicated region
  $region6: #{bert_regression_forward.1} parent=0 // pred_check
    _
  $region7: #{bert_regression_forward.1} parent=0 // pred_check_branch
    %25 = sbr.rel (0) target = $region9
  $region8: #{bert_regression_forward.1} parent=0 // pred_region
    _
  $region9: #{bert_regression_forward.1} parent=0 // pred_fallthru
    _
  // Predicated region
  $region10: #{bert_regression_forward.1} parent=0 // pred_check
    _
  $region11: #{bert_regression_forward.1} parent=0 // pred_check_branch
    %27 = sbr.rel (0) target = $region13
  $region12: #{bert_regression_forward.1} parent=0 // pred_region
    _
  $region13: #{bert_regression_forward.1} parent=0 // pred_fallthru
    _
  // Predicated region
  $region14: #{bert_regression_forward.1} parent=0 // pred_check
    _
  $region15: #{bert_regression_forward.1} parent=0 // pred_check_branch
    %29 = sbr.rel (0) target = $region17
  $region16: #{bert_regression_forward.1} parent=0 // pred_region
    _
  $region17: #{bert_regression_forward.1} parent=0 // pred_fallthru
    _
  // Predicated region
  $region18: #{bert_regression_forward.1} parent=0 // pred_check
    _
  $region19: #{bert_regression_forward.1} parent=0 // pred_check_branch
    %31 = sbr.rel (0) target = $region21
  $region20: #{bert_regression_forward.1} parent=0 // pred_region
    _
  $region21: #{bert_regression_forward.1} parent=0 // pred_fallthru
    _
  // Predicated region
  $region22: #{bert_regression_forward.1} parent=0 // pred_check
    _
  $region23: #{bert_regression_forward.1} parent=0 // pred_check_branch
    %33 = sbr.rel (0) target = $region25
  $region24: #{bert_regression_forward.1} parent=0 // pred_region
    _
  $region25: #{bert_regression_forward.1} parent=0 // pred_fallthru
    _
  // Predicated region
  $region26: #{bert_regression_forward.1} parent=0 // pred_check
    _
  $region27: #{bert_regression_forward.1} parent=0 // pred_check_branch
    %35 = sbr.rel (0) target = $region29
  $region28: #{bert_regression_forward.1} parent=0 // pred_region
    _
  $region29: #{bert_regression_forward.1} parent=0 // pred_fallthru
    _
  // Predicated region
  $region30: #{bert_regression_forward.1} parent=0 // pred_check
    _
  $region31: #{bert_regression_forward.1} parent=0 // pred_check_branch
    %37 = sbr.rel (0) target = $region33
  $region32: #{bert_regression_forward.1} parent=0 // pred_region
    _
  $region33: #{bert_regression_forward.1} parent=0 // pred_fallthru
    _
  // Predicated region
  $region34: #{bert_regression_forward.1} parent=0 // pred_check
    _
  $region35: #{bert_regression_forward.1} parent=0 // pred_check_branch
    %39 = sbr.rel (0) target = $region37
  $region36: #{bert_regression_forward.1} parent=0 // pred_region
    _
  $region37: #{bert_regression_forward.1} parent=0 // pred_fallthru
    _
  // Predicated region
  $region38: #{bert_regression_forward.1} parent=0 // pred_check
    _
  $region39: #{bert_regression_forward.1} parent=0 // pred_check_branch
    %41 = sbr.rel (0) target = $region41
  $region40: #{bert_regression_forward.1} parent=0 // pred_region
    _
  $region41: #{bert_regression_forward.1} parent=0 // pred_fallthru
    _
  // Predicated region
  $region42: #{bert_regression_forward.1} parent=0 // pred_check
    _
  $region43: #{bert_regression_forward.1} parent=0 // pred_check_branch
    %43 = sbr.rel (0) target = $region45
  $region44: #{bert_regression_forward.1} parent=0 // pred_region
    _
  $region45: #{bert_regression_forward.1} parent=0 // pred_fallthru
    _
  // Predicated region
  $region46: #{bert_regression_forward.1} parent=0 // pred_check
    _
  $region47: #{bert_regression_forward.1} parent=0 // pred_check_branch
    %45 = sbr.rel (0) target = $region49
  $region48: #{bert_regression_forward.1} parent=0 // pred_region
    _
  $region49: #{bert_regression_forward.1} parent=0 // pred_fallthru
    _
  // Predicated region
  $region50: #{bert_regression_forward.1} parent=0 // pred_check
    _
  $region51: #{bert_regression_forward.1} parent=0 // pred_check_branch
    %47 = sbr.rel (0) target = $region53
  $region52: #{bert_regression_forward.1} parent=0 // pred_region
    _
  $region53: #{bert_regression_forward.1} parent=0 // pred_fallthru
    _
  // Predicated region
  $region54: #{bert_regression_forward.1} parent=0 // pred_check
    _
  $region55: #{bert_regression_forward.1} parent=0 // pred_check_branch
    %49 = sbr.rel (0) target = $region57
  $region56: #{bert_regression_forward.1} parent=0 // pred_region
    _
  $region57: #{bert_regression_forward.1} parent=0 // pred_fallthru
    _
  // Predicated region
  $region58: #{bert_regression_forward.1} parent=0 // pred_check
    _
  $region59: #{bert_regression_forward.1} parent=0 // pred_check_branch
    %51 = sbr.rel (0) target = $region61
  $region60: #{bert_regression_forward.1} parent=0 // pred_region
    _
  $region61: #{bert_regression_forward.1} parent=0 // pred_fallthru
    _
  %v53 = vld [vmem:[%s0] sm:$0xff]
  %v54 = vld [vmem:[%s0 + $0x8] sm:$0xff]
  %v55 = vld [vmem:[%s2] sm:$0x1]
  %v56 = vld [vmem:[%s2 + $0x1] sm:$0x1]
  %vm57 = vcmask 261120
  %v58 = vsel %vm57, %v53, 0.0
  %59 = vadd.xlane.f32.xlu0 %v58
  %v60 = vpop.xlane.xlu0 %59
  %v61 = vsel %vm57, %v54, 0.0
  %62 = vadd.xlane.f32.xlu0 %v61
  %v63 = vpop.xlane.xlu0 %62
  %v64 = vrcp.pop 32.0
  %v65 = vmul.f32 %v60, %v64
  %v66 = vmul.f32 %v63, %v64
  %v67 = vsub.f32 %v53, %v65
  %v68 = vsub.f32 %v54, %v66
  %v69 = vmul.f32 %v67, %v67
  %v70 = vmul.f32 %v68, %v68
  %v71 = vsel %vm57, %v69, 0.0
  %72 = vadd.xlane.f32.xlu0 %v71
  %v73 = vpop.xlane.xlu0 %72
  %v74 = vsel %vm57, %v70, 0.0
  %75 = vadd.xlane.f32.xlu0 %v74
  %v76 = vpop.xlane.xlu0 %75
  %v77 = vmul.f32 %v73, %v64
  %v78 = vmul.f32 %v76, %v64
  %v79 = vadd.f32 %v77, 1e-12
  %v80 = vadd.f32 %v78, 1e-12
  %v81 = vrsqrt.pop %v79
  %v82 = vrsqrt.pop %v80
  %v83 = vmul.f32 %v67, %v81
  %v84 = vmul.f32 %v68, %v82
  %v85 = vlaneseq
  %v86 = vshrl.u32 %v85, 7
  %v87 = vsub.s32 0, %v86
  %v88 = vrot.slane %v55, %v87
  %v89 = vmul.f32 %v83, %v88
  %v90 = vmul.f32 %v84, %v88
  %v91 = vlaneseq
  %v92 = vshrl.u32 %v91, 7
  %v93 = vsub.s32 0, %v92
  %v94 = vrot.slane %v56, %v93
  %v95 = vadd.f32 %v89, %v94
  %v96 = vadd.f32 %v90, %v94
  %v97 = vld [vmem:[%s1] sm:$0xff]
  %v98 = vld [vmem:[%s1 + $0x8] sm:$0xff]
  %v99 = vld [vmem:[%s3] sm:$0xf]
  %v100 = vld [vmem:[%s3 + $0x4] sm:$0xf]
  %v101 = vld [vmem:[%s3 + $0x8] sm:$0xf]
  %v102 = vld [vmem:[%s3 + $0xc] sm:$0xf]
  %v103 = vld [vmem:[%s5] sm:$0xf]
  %v104 = vld [vmem:[%s5 + $0x4] sm:$0xf]
  %v105 = vld [vmem:[%s5 + $0x8] sm:$0xf]
  %v106 = vld [vmem:[%s5 + $0xc] sm:$0xf]
  %v107 = vld [vmem:[%s8] sm:$0xf]
  %v108 = vld [vmem:[%s8 + $0x4] sm:$0xf]
  %v109 = vld [vmem:[%s8 + $0x8] sm:$0xf]
  %v110 = vld [vmem:[%s8 + $0xc] sm:$0xf]
  %v111 = vld [vmem:[%s10] sm:$0xf]
  %v112 = vld [vmem:[%s10 + $0x4] sm:$0xf]
  %v113 = vld [vmem:[%s10 + $0x8] sm:$0xf]
  %v114 = vld [vmem:[%s10 + $0xc] sm:$0xf]
  %v115 = vld [vmem:[%s10 + $0x10] sm:$0xf]
  %v116 = vld [vmem:[%s10 + $0x14] sm:$0xf]
  %v117 = vld [vmem:[%s10 + $0x18] sm:$0xf]
  %v118 = vld [vmem:[%s10 + $0x1c] sm:$0xf]
  %v119 = vpack.c.bf16 %v96, %v95
  %v120 = vld [vmem:[%s4] sm:$0x1]
  %v122 = vlaneseq
  %v123 = vshrl.u32 %v122, 7
  %v124 = vsub.s32 0, %v123
  %v125 = vrot.slane %v120, %v124
  %v131 = vunpack.c.l.b16 %v99
  %v132 = vunpack.c.l.b16 %v100
  %v133 = vunpack.c.l.b16 %v101
  %v134 = vunpack.c.l.b16 %v102
  %v135 = vpack.c.b16 %v132, %v131
  %v136 = vpack.c.b16 %v134, %v133
  %v140 = vsel %vm57, %v119, 0
  %142 = vmatprep.subr.bf16.mxu0 0
  %143 = vmatpush1.bf16.msra.mxu0 0
  %144 = vmatprep.subr.bf16.mxu0 0
  %145 = vmatpush1.bf16.msra.mxu0 0
  %146 = vmatprep.subr.bf16.mxu0 0
  %147 = vmatpush1.bf16.msra.mxu0 0
  %148 = vmatprep.subr.bf16.mxu0 0
  %149 = vmatpush1.bf16.msra.mxu0 0
  %150 = vmatprep.subr.bf16.mxu0 0
  %151 = vmatpush1.bf16.msra.mxu0 0
  %152 = vmatprep.subr.bf16.mxu0 0
  %153 = vmatpush1.bf16.msra.mxu0 0
  %154 = vmatprep.subr.bf16.mxu0 0
  %155 = vmatpush1.bf16.msra.mxu0 %v136
  %156 = vmatprep.subr.bf16.mxu0 0
  %157 = vmatpush1.bf16.msra.mxu0 %v135
  %158 = vmatprep.subr.bf16.mxu0 0
  %159 = vmatpush2.bf16.msra.mxu0 0
  %160 = vmatprep.subr.bf16.mxu0 0
  %161 = vmatpush2.bf16.msra.mxu0 0
  %162 = vmatprep.subr.bf16.mxu0 0
  %163 = vmatpush2.bf16.msra.mxu0 0
  %164 = vmatprep.subr.bf16.mxu0 0
  %165 = vmatpush2.bf16.msra.mxu0 0
  %166 = vmatprep.subr.bf16.mxu0 0
  %167 = vmatpush2.bf16.msra.mxu0 0
  %168 = vmatprep.subr.bf16.mxu0 0
  %169 = vmatpush2.bf16.msra.mxu0 0
  %170 = vmatprep.subr.bf16.mxu0 0
  %171 = vmatpush2.bf16.msra.mxu0 0
  %172 = vmatprep.subr.bf16.mxu0 0
  %173 = vmatpush2.bf16.msra.mxu0 0
  %174 = vmatprep.mubr.bf16.mxu0 0
  %175 = vmatmul.mubr.bf16.gmra.mxu0 %v140
  %v176 = vpop.f32.mrf.mxu0
  %v177 = vadd.f32 %v125, %v176
  %v178 = vpop.f32.mrf.mxu0
  %v179 = vpop.f32.mrf.mxu0
  %v180 = vadd.f32 %v125, %v179
  %v181 = vpop.f32.mrf.mxu0
  %182 = vdwg.mxu0
  %v183 = vpack.c.bf16 %v180, %v177
  %185 = vrot.lane.b32.xlu0 %v183, 96
  %v186 = vpop.permute.xlu0 %185
  %vm187 = vcmask 130048
  %v189 = vsel %vm187, %v183, 0
  %v192 = vsel %vm187, %v186, 0
  %194 = vmatprep.subr.bf16.mxu0 0
  %195 = vmatpush1.bf16.xpose.msra.mxu0 0
  %196 = vmatprep.subr.bf16.mxu0 0
  %197 = vmatpush1.bf16.xpose.msra.mxu0 0
  %198 = vmatprep.subr.bf16.mxu0 0
  %199 = vmatpush1.bf16.xpose.msra.mxu0 0
  %200 = vmatprep.subr.bf16.mxu0 0
  %201 = vmatpush1.bf16.xpose.msra.mxu0 0
  %202 = vmatprep.subr.bf16.mxu0 0
  %203 = vmatpush1.bf16.xpose.msra.mxu0 0
  %204 = vmatprep.subr.bf16.mxu0 0
  %205 = vmatpush1.bf16.xpose.msra.mxu0 0
  %206 = vmatprep.subr.bf16.mxu0 0
  %207 = vmatpush1.bf16.xpose.msra.mxu0 0
  %208 = vmatprep.subr.bf16.mxu0 0
  %209 = vmatpush1.bf16.xpose.msra.mxu0 %v192
  %210 = vmatprep.subr.bf16.mxu0 0
  %211 = vmatpush2.bf16.xpose.msra.mxu0 0
  %212 = vmatprep.subr.bf16.mxu0 0
  %213 = vmatpush2.bf16.xpose.msra.mxu0 0
  %214 = vmatprep.subr.bf16.mxu0 0
  %215 = vmatpush2.bf16.xpose.msra.mxu0 0
  %216 = vmatprep.subr.bf16.mxu0 0
  %217 = vmatpush2.bf16.xpose.msra.mxu0 0
  %218 = vmatprep.subr.bf16.mxu0 0
  %219 = vmatpush2.bf16.xpose.msra.mxu0 0
  %220 = vmatprep.subr.bf16.mxu0 0
  %221 = vmatpush2.bf16.xpose.msra.mxu0 0
  %222 = vmatprep.subr.bf16.mxu0 0
  %223 = vmatpush2.bf16.xpose.msra.mxu0 0
  %224 = vmatprep.subr.bf16.mxu0 0
  %225 = vmatpush2.bf16.xpose.msra.mxu0 0
  %226 = vmatprep.mubr.bf16.mxu0 0
  %227 = vmatmul.mubr.bf16.gmra.mxu0 %v189
  %v228 = vpop.f32.mrf.mxu0
  %v229 = vadd.f32 %v97, %v228
  %v230 = vpop.f32.mrf.mxu0
  %v231 = vpop.f32.mrf.mxu0
  %v232 = vadd.f32 %v98, %v231
  %v233 = vpop.f32.mrf.mxu0
  %234 = vdwg.mxu0
  %v235 = vsel %vm187, %v229, -inf
  %236 = vmax.xlane.f32.xlu0 %v235
  %v237 = vpop.xlane.xlu0 %236
  %v238 = vsel %vm187, %v232, -inf
  %239 = vmax.xlane.f32.xlu0 %v238
  %v240 = vpop.xlane.xlu0 %239
  %v241 = vsub.f32 %v229, %v237
  %v242 = vsub.f32 %v232, %v240
  %v243 = vmul.f32 %v241, 1.442695
  %v244 = vpow.pop %v243
  %v245 = vmul.f32 %v242, 1.442695
  %v246 = vpow.pop %v245
  %v247 = vsel %vm187, %v244, 0.0
  %248 = vadd.xlane.f32.xlu0 %v247
  %v249 = vpop.xlane.xlu0 %248
  %v250 = vsel %vm187, %v246, 0.0
  %251 = vadd.xlane.f32.xlu0 %v250
  %v252 = vpop.xlane.xlu0 %251
  %v253 = vrcp.pop %v249
  %v254 = vrcp.pop %v252
  %v255 = vmul.f32 %v244, %v253
  %v256 = vmul.f32 %v246, %v254
  %v257 = vpack.c.bf16 %v256, %v255
  %258 = vrot.lane.b32.xlu0 %v183, 64
  %v259 = vpop.permute.xlu0 %258
  %v262 = vsel %vm187, %v257, 0
  %264 = vmatprep.subr.bf16.mxu0 0
  %265 = vmatpush1.bf16.msra.mxu0 0
  %266 = vmatprep.subr.bf16.mxu0 0
  %267 = vmatpush1.bf16.msra.mxu0 0
  %268 = vmatprep.subr.bf16.mxu0 0
  %269 = vmatpush1.bf16.msra.mxu0 0
  %270 = vmatprep.subr.bf16.mxu0 0
  %271 = vmatpush1.bf16.msra.mxu0 0
  %272 = vmatprep.subr.bf16.mxu0 0
  %273 = vmatpush1.bf16.msra.mxu0 0
  %274 = vmatprep.subr.bf16.mxu0 0
  %275 = vmatpush1.bf16.msra.mxu0 0
  %276 = vmatprep.subr.bf16.mxu0 0
  %277 = vmatpush1.bf16.msra.mxu0 0
  %278 = vmatprep.subr.bf16.mxu0 0
  %279 = vmatpush1.bf16.msra.mxu0 %v259
  %280 = vmatprep.subr.bf16.mxu0 0
  %281 = vmatpush2.bf16.msra.mxu0 0
  %282 = vmatprep.subr.bf16.mxu0 0
  %283 = vmatpush2.bf16.msra.mxu0 0
  %284 = vmatprep.subr.bf16.mxu0 0
  %285 = vmatpush2.bf16.msra.mxu0 0
  %286 = vmatprep.subr.bf16.mxu0 0
  %287 = vmatpush2.bf16.msra.mxu0 0
  %288 = vmatprep.subr.bf16.mxu0 0
  %289 = vmatpush2.bf16.msra.mxu0 0
  %290 = vmatprep.subr.bf16.mxu0 0
  %291 = vmatpush2.bf16.msra.mxu0 0
  %292 = vmatprep.subr.bf16.mxu0 0
  %293 = vmatpush2.bf16.msra.mxu0 0
  %294 = vmatprep.subr.bf16.mxu0 0
  %295 = vmatpush2.bf16.msra.mxu0 0
  %296 = vmatprep.mubr.bf16.mxu0 0
  %297 = vmatmul.mubr.bf16.gmra.mxu0 %v262
  %v298 = vpop.f32.mrf.mxu0
  %v299 = vadd.f32 0.0, %v298
  %v300 = vpop.f32.mrf.mxu0
  %v301 = vpop.f32.mrf.mxu0
  %v302 = vadd.f32 0.0, %v301
  %v303 = vpop.f32.mrf.mxu0
  %304 = vdwg.mxu0
  %v305 = vpack.c.bf16 %v302, %v299
  %306 = vrot.lane.b32.xlu0 %v183, 112
  %v307 = vpop.permute.xlu0 %306
  %308 = vrot.lane.b32.xlu0 %v183, 80
  %v309 = vpop.permute.xlu0 %308
  %v311 = vsel %vm187, %v307, 0
  %v314 = vsel %vm187, %v309, 0
  %316 = vmatprep.subr.bf16.mxu0 0
  %317 = vmatpush1.bf16.xpose.msra.mxu0 0
  %318 = vmatprep.subr.bf16.mxu0 0
  %319 = vmatpush1.bf16.xpose.msra.mxu0 0
  %320 = vmatprep.subr.bf16.mxu0 0
  %321 = vmatpush1.bf16.xpose.msra.mxu0 0
  %322 = vmatprep.subr.bf16.mxu0 0
  %323 = vmatpush1.bf16.xpose.msra.mxu0 0
  %324 = vmatprep.subr.bf16.mxu0 0
  %325 = vmatpush1.bf16.xpose.msra.mxu0 0
  %326 = vmatprep.subr.bf16.mxu0 0
  %327 = vmatpush1.bf16.xpose.msra.mxu0 0
  %328 = vmatprep.subr.bf16.mxu0 0
  %329 = vmatpush1.bf16.xpose.msra.mxu0 0
  %330 = vmatprep.subr.bf16.mxu0 0
  %331 = vmatpush1.bf16.xpose.msra.mxu0 %v314
  %332 = vmatprep.subr.bf16.mxu0 0
  %333 = vmatpush2.bf16.xpose.msra.mxu0 0
  %334 = vmatprep.subr.bf16.mxu0 0
  %335 = vmatpush2.bf16.xpose.msra.mxu0 0
  %336 = vmatprep.subr.bf16.mxu0 0
  %337 = vmatpush2.bf16.xpose.msra.mxu0 0
  %338 = vmatprep.subr.bf16.mxu0 0
  %339 = vmatpush2.bf16.xpose.msra.mxu0 0
  %340 = vmatprep.subr.bf16.mxu0 0
  %341 = vmatpush2.bf16.xpose.msra.mxu0 0
  %342 = vmatprep.subr.bf16.mxu0 0
  %343 = vmatpush2.bf16.xpose.msra.mxu0 0
  %344 = vmatprep.subr.bf16.mxu0 0
  %345 = vmatpush2.bf16.xpose.msra.mxu0 0
  %346 = vmatprep.subr.bf16.mxu0 0
  %347 = vmatpush2.bf16.xpose.msra.mxu0 0
  %348 = vmatprep.mubr.bf16.mxu0 0
  %349 = vmatmul.mubr.bf16.gmra.mxu0 %v311
  %v350 = vpop.f32.mrf.mxu0
  %v351 = vadd.f32 %v97, %v350
  %v352 = vpop.f32.mrf.mxu0
  %v353 = vpop.f32.mrf.mxu0
  %v354 = vadd.f32 %v98, %v353
  %v355 = vpop.f32.mrf.mxu0
  %356 = vdwg.mxu0
  %v357 = vsel %vm187, %v351, -inf
  %358 = vmax.xlane.f32.xlu0 %v357
  %v359 = vpop.xlane.xlu0 %358
  %v360 = vsel %vm187, %v354, -inf
  %361 = vmax.xlane.f32.xlu0 %v360
  %v362 = vpop.xlane.xlu0 %361
  %v363 = vsub.f32 %v351, %v359
  %v364 = vsub.f32 %v354, %v362
  %v365 = vmul.f32 %v363, 1.442695
  %v366 = vpow.pop %v365
  %v367 = vmul.f32 %v364, 1.442695
  %v368 = vpow.pop %v367
  %v369 = vsel %vm187, %v366, 0.0
  %370 = vadd.xlane.f32.xlu0 %v369
  %v371 = vpop.xlane.xlu0 %370
  %v372 = vsel %vm187, %v368, 0.0
  %373 = vadd.xlane.f32.xlu0 %v372
  %v374 = vpop.xlane.xlu0 %373
  %v375 = vrcp.pop %v371
  %v376 = vrcp.pop %v374
  %v377 = vmul.f32 %v366, %v375
  %v378 = vmul.f32 %v368, %v376
  %v379 = vpack.c.bf16 %v378, %v377
  %380 = vrot.lane.b32.xlu0 %v183, 48
  %v381 = vpop.permute.xlu0 %380
  %v384 = vsel %vm187, %v379, 0
  %386 = vmatprep.subr.bf16.mxu0 0
  %387 = vmatpush1.bf16.msra.mxu0 0
  %388 = vmatprep.subr.bf16.mxu0 0
  %389 = vmatpush1.bf16.msra.mxu0 0
  %390 = vmatprep.subr.bf16.mxu0 0
  %391 = vmatpush1.bf16.msra.mxu0 0
  %392 = vmatprep.subr.bf16.mxu0 0
  %393 = vmatpush1.bf16.msra.mxu0 0
  %394 = vmatprep.subr.bf16.mxu0 0
  %395 = vmatpush1.bf16.msra.mxu0 0
  %396 = vmatprep.subr.bf16.mxu0 0
  %397 = vmatpush1.bf16.msra.mxu0 0
  %398 = vmatprep.subr.bf16.mxu0 0
  %399 = vmatpush1.bf16.msra.mxu0 0
  %400 = vmatprep.subr.bf16.mxu0 0
  %401 = vmatpush1.bf16.msra.mxu0 %v381
  %402 = vmatprep.subr.bf16.mxu0 0
  %403 = vmatpush2.bf16.msra.mxu0 0
  %404 = vmatprep.subr.bf16.mxu0 0
  %405 = vmatpush2.bf16.msra.mxu0 0
  %406 = vmatprep.subr.bf16.mxu0 0
  %407 = vmatpush2.bf16.msra.mxu0 0
  %408 = vmatprep.subr.bf16.mxu0 0
  %409 = vmatpush2.bf16.msra.mxu0 0
  %410 = vmatprep.subr.bf16.mxu0 0
  %411 = vmatpush2.bf16.msra.mxu0 0
  %412 = vmatprep.subr.bf16.mxu0 0
  %413 = vmatpush2.bf16.msra.mxu0 0
  %414 = vmatprep.subr.bf16.mxu0 0
  %415 = vmatpush2.bf16.msra.mxu0 0
  %416 = vmatprep.subr.bf16.mxu0 0
  %417 = vmatpush2.bf16.msra.mxu0 0
  %418 = vmatprep.mubr.bf16.mxu0 0
  %419 = vmatmul.mubr.bf16.gmra.mxu0 %v384
  %v420 = vpop.f32.mrf.mxu0
  %v421 = vadd.f32 0.0, %v420
  %v422 = vpop.f32.mrf.mxu0
  %v423 = vpop.f32.mrf.mxu0
  %v424 = vadd.f32 0.0, %v423
  %v425 = vpop.f32.mrf.mxu0
  %426 = vdwg.mxu0
  %v427 = vpack.c.bf16 %v424, %v421
  %v430 = vunpack.c.l.b16 %v105
  %v431 = vunpack.c.l.b16 %v106
  %v432 = vpack.c.b16 %v431, %v430
  %v435 = vsel %vm187, %v427, 0
  %437 = vmatprep.subr.bf16.mxu0 0
  %438 = vmatpush1.bf16.msra.mxu0 0
  %439 = vmatprep.subr.bf16.mxu0 0
  %440 = vmatpush1.bf16.msra.mxu0 0
  %441 = vmatprep.subr.bf16.mxu0 0
  %442 = vmatpush1.bf16.msra.mxu0 0
  %443 = vmatprep.subr.bf16.mxu0 0
  %444 = vmatpush1.bf16.msra.mxu0 0
  %445 = vmatprep.subr.bf16.mxu0 0
  %446 = vmatpush1.bf16.msra.mxu0 0
  %447 = vmatprep.subr.bf16.mxu0 0
  %448 = vmatpush1.bf16.msra.mxu0 0
  %449 = vmatprep.subr.bf16.mxu0 0
  %450 = vmatpush1.bf16.msra.mxu0 0
  %451 = vmatprep.subr.bf16.mxu0 0
  %452 = vmatpush1.bf16.msra.mxu0 %v432
  %453 = vmatprep.subr.bf16.mxu0 0
  %454 = vmatpush2.bf16.msra.mxu0 0
  %455 = vmatprep.subr.bf16.mxu0 0
  %456 = vmatpush2.bf16.msra.mxu0 0
  %457 = vmatprep.subr.bf16.mxu0 0
  %458 = vmatpush2.bf16.msra.mxu0 0
  %459 = vmatprep.subr.bf16.mxu0 0
  %460 = vmatpush2.bf16.msra.mxu0 0
  %461 = vmatprep.subr.bf16.mxu0 0
  %462 = vmatpush2.bf16.msra.mxu0 0
  %463 = vmatprep.subr.bf16.mxu0 0
  %464 = vmatpush2.bf16.msra.mxu0 0
  %465 = vmatprep.subr.bf16.mxu0 0
  %466 = vmatpush2.bf16.msra.mxu0 0
  %467 = vmatprep.subr.bf16.mxu0 0
  %468 = vmatpush2.bf16.msra.mxu0 0
  %469 = vmatprep.mubr.bf16.mxu0 0
  %470 = vmatmul.mubr.bf16.gmra.mxu0 %v435
  %v471 = vpop.f32.mrf.mxu0
  %v472 = vadd.f32 0.0, %v471
  %v473 = vpop.f32.mrf.mxu0
  %v474 = vpop.f32.mrf.mxu0
  %v475 = vadd.f32 0.0, %v474
  %v476 = vpop.f32.mrf.mxu0
  %477 = vdwg.mxu0
  %v480 = vunpack.c.l.b16 %v103
  %v481 = vunpack.c.l.b16 %v104
  %v482 = vpack.c.b16 %v481, %v480
  %v485 = vsel %vm187, %v305, 0
  %487 = vmatprep.subr.bf16.mxu0 0
  %488 = vmatpush1.bf16.msra.mxu0 0
  %489 = vmatprep.subr.bf16.mxu0 0
  %490 = vmatpush1.bf16.msra.mxu0 0
  %491 = vmatprep.subr.bf16.mxu0 0
  %492 = vmatpush1.bf16.msra.mxu0 0
  %493 = vmatprep.subr.bf16.mxu0 0
  %494 = vmatpush1.bf16.msra.mxu0 0
  %495 = vmatprep.subr.bf16.mxu0 0
  %496 = vmatpush1.bf16.msra.mxu0 0
  %497 = vmatprep.subr.bf16.mxu0 0
  %498 = vmatpush1.bf16.msra.mxu0 0
  %499 = vmatprep.subr.bf16.mxu0 0
  %500 = vmatpush1.bf16.msra.mxu0 0
  %501 = vmatprep.subr.bf16.mxu0 0
  %502 = vmatpush1.bf16.msra.mxu0 %v482
  %503 = vmatprep.subr.bf16.mxu0 0
  %504 = vmatpush2.bf16.msra.mxu0 0
  %505 = vmatprep.subr.bf16.mxu0 0
  %506 = vmatpush2.bf16.msra.mxu0 0
  %507 = vmatprep.subr.bf16.mxu0 0
  %508 = vmatpush2.bf16.msra.mxu0 0
  %509 = vmatprep.subr.bf16.mxu0 0
  %510 = vmatpush2.bf16.msra.mxu0 0
  %511 = vmatprep.subr.bf16.mxu0 0
  %512 = vmatpush2.bf16.msra.mxu0 0
  %513 = vmatprep.subr.bf16.mxu0 0
  %514 = vmatpush2.bf16.msra.mxu0 0
  %515 = vmatprep.subr.bf16.mxu0 0
  %516 = vmatpush2.bf16.msra.mxu0 0
  %517 = vmatprep.subr.bf16.mxu0 0
  %518 = vmatpush2.bf16.msra.mxu0 0
  %519 = vmatprep.mubr.bf16.mxu0 0
  %520 = vmatmul.mubr.bf16.gmra.mxu0 %v485
  %v521 = vpop.f32.mrf.mxu0
  %v522 = vadd.f32 %v472, %v521
  %v523 = vpop.f32.mrf.mxu0
  %v524 = vpop.f32.mrf.mxu0
  %v525 = vadd.f32 %v475, %v524
  %v526 = vpop.f32.mrf.mxu0
  %527 = vdwg.mxu0
  %v528 = vld [vmem:[%s6] sm:$0x1]
  %v530 = vlaneseq
  %v531 = vshrl.u32 %v530, 7
  %v532 = vsub.s32 0, %v531
  %v533 = vrot.slane %v528, %v532
  %v535 = vadd.f32 %v522, %v533
  %v536 = vadd.f32 %v525, %v533
  %v537 = vld [vmem:[%s7] sm:$0x3]
  %v538 = vadd.f32 %v535, %v95
  %v539 = vadd.f32 %v536, %v96
  %v540 = vsel %vm57, %v538, 0.0
  %541 = vadd.xlane.f32.xlu0 %v540
  %v542 = vpop.xlane.xlu0 %541
  %v543 = vsel %vm57, %v539, 0.0
  %544 = vadd.xlane.f32.xlu0 %v543
  %v545 = vpop.xlane.xlu0 %544
  %v546 = vmul.f32 %v542, %v64
  %v547 = vmul.f32 %v545, %v64
  %v548 = vsub.f32 %v538, %v546
  %v549 = vsub.f32 %v539, %v547
  %v550 = vmul.f32 %v548, %v548
  %v551 = vmul.f32 %v549, %v549
  %v552 = vsel %vm57, %v550, 0.0
  %553 = vadd.xlane.f32.xlu0 %v552
  %v554 = vpop.xlane.xlu0 %553
  %v555 = vsel %vm57, %v551, 0.0
  %556 = vadd.xlane.f32.xlu0 %v555
  %v557 = vpop.xlane.xlu0 %556
  %v558 = vmul.f32 %v554, %v64
  %v559 = vmul.f32 %v557, %v64
  %v560 = vadd.f32 %v558, 1e-12
  %v561 = vadd.f32 %v559, 1e-12
  %v562 = vrsqrt.pop %v560
  %v563 = vrsqrt.pop %v561
  %v564 = vmul.f32 %v548, %v562
  %v565 = vmul.f32 %v549, %v563
  %v566 = vlaneseq
  %v567 = vshrl.u32 %v566, 7
  %v568 = vsub.s32 0, %v567
  %v569 = vrot.slane %v537, %v568
  %v570 = vmul.f32 %v564, %v569
  %v571 = vmul.f32 %v565, %v569
  %v572 = vlaneseq
  %v573 = vshrl.u32 %v572, 7
  %v574 = vsub.s32 1, %v573
  %v575 = vrot.slane %v537, %v574
  %v576 = vadd.f32 %v570, %v575
  %v577 = vadd.f32 %v571, %v575
  %v578 = vpack.c.bf16 %v577, %v576
  %v579 = vld [vmem:[%s9] sm:$0x1]
  %v581 = vlaneseq
  %v582 = vshrl.u32 %v581, 7
  %v583 = vsub.s32 0, %v582
  %v584 = vrot.slane %v579, %v583
  %v590 = vunpack.c.l.b16 %v107
  %v591 = vunpack.c.l.b16 %v108
  %v592 = vunpack.c.l.b16 %v109
  %v593 = vunpack.c.l.b16 %v110
  %v594 = vpack.c.b16 %v591, %v590
  %v595 = vpack.c.b16 %v593, %v592
  %v599 = vsel %vm57, %v578, 0
  %601 = vmatprep.subr.bf16.mxu0 0
  %602 = vmatpush1.bf16.msra.mxu0 0
  %603 = vmatprep.subr.bf16.mxu0 0
  %604 = vmatpush1.bf16.msra.mxu0 0
  %605 = vmatprep.subr.bf16.mxu0 0
  %606 = vmatpush1.bf16.msra.mxu0 0
  %607 = vmatprep.subr.bf16.mxu0 0
  %608 = vmatpush1.bf16.msra.mxu0 0
  %609 = vmatprep.subr.bf16.mxu0 0
  %610 = vmatpush1.bf16.msra.mxu0 0
  %611 = vmatprep.subr.bf16.mxu0 0
  %612 = vmatpush1.bf16.msra.mxu0 0
  %613 = vmatprep.subr.bf16.mxu0 0
  %614 = vmatpush1.bf16.msra.mxu0 %v595
  %615 = vmatprep.subr.bf16.mxu0 0
  %616 = vmatpush1.bf16.msra.mxu0 %v594
  %617 = vmatprep.subr.bf16.mxu0 0
  %618 = vmatpush2.bf16.msra.mxu0 0
  %619 = vmatprep.subr.bf16.mxu0 0
  %620 = vmatpush2.bf16.msra.mxu0 0
  %621 = vmatprep.subr.bf16.mxu0 0
  %622 = vmatpush2.bf16.msra.mxu0 0
  %623 = vmatprep.subr.bf16.mxu0 0
  %624 = vmatpush2.bf16.msra.mxu0 0
  %625 = vmatprep.subr.bf16.mxu0 0
  %626 = vmatpush2.bf16.msra.mxu0 0
  %627 = vmatprep.subr.bf16.mxu0 0
  %628 = vmatpush2.bf16.msra.mxu0 0
  %629 = vmatprep.subr.bf16.mxu0 0
  %630 = vmatpush2.bf16.msra.mxu0 0
  %631 = vmatprep.subr.bf16.mxu0 0
  %632 = vmatpush2.bf16.msra.mxu0 0
  %633 = vmatprep.mubr.bf16.mxu0 0
  %634 = vmatmul.mubr.bf16.gmra.mxu0 %v599
  %v635 = vpop.f32.mrf.mxu0
  %v636 = vadd.f32 %v584, %v635
  %v637 = vpop.f32.mrf.mxu0
  %v638 = vpop.f32.mrf.mxu0
  %v639 = vadd.f32 %v584, %v638
  %v640 = vpop.f32.mrf.mxu0
  %641 = vdwg.mxu0
  %v642 = vmul.f32 %v636, %v636
  %v643 = vmul.f32 %v639, %v639
  %v644 = vmul.f32 %v636, %v642
  %v645 = vmul.f32 %v639, %v643
  %v646 = vmul.f32 %v644, 0.044715
  %v647 = vmul.f32 %v645, 0.044715
  %v648 = vadd.f32 %v636, %v646
  %v649 = vadd.f32 %v639, %v647
  %v650 = vmul.f32 %v648, 0.7978846
  %v651 = vmul.f32 %v649, 0.7978846
  %v652 = vtanh.pop %v650
  %v653 = vtanh.pop %v651
  %v654 = vadd.f32 %v652, 1.0
  %v655 = vadd.f32 %v653, 1.0
  %v656 = vmul.f32 %v654, 0.5
  %v657 = vmul.f32 %v655, 0.5
  %v658 = vmul.f32 %v636, %v656
  %v659 = vmul.f32 %v639, %v657
  %v660 = vpack.c.bf16 %v659, %v658
  %v661 = vld [vmem:[%s11] sm:$0x1]
  %v663 = vlaneseq
  %v664 = vshrl.u32 %v663, 7
  %v665 = vsub.s32 0, %v664
  %v666 = vrot.slane %v661, %v665
  %v676 = vunpack.c.l.b16 %v111
  %v677 = vunpack.c.l.b16 %v112
  %v678 = vunpack.c.l.b16 %v113
  %v679 = vunpack.c.l.b16 %v114
  %v680 = vunpack.c.l.b16 %v115
  %v681 = vunpack.c.l.b16 %v116
  %v682 = vunpack.c.l.b16 %v117
  %v683 = vunpack.c.l.b16 %v118
  %v684 = vpack.c.b16 %v677, %v676
  %v685 = vpack.c.b16 %v679, %v678
  %v686 = vpack.c.b16 %v681, %v680
  %v687 = vpack.c.b16 %v683, %v682
  %vm692 = vcmask 523264
  %v694 = vsel %vm692, %v660, 0
  %696 = vmatprep.subr.bf16.mxu0 0
  %697 = vmatpush1.bf16.msra.mxu0 0
  %698 = vmatprep.subr.bf16.mxu0 0
  %699 = vmatpush1.bf16.msra.mxu0 0
  %700 = vmatprep.subr.bf16.mxu0 0
  %701 = vmatpush1.bf16.msra.mxu0 0
  %702 = vmatprep.subr.bf16.mxu0 0
  %703 = vmatpush1.bf16.msra.mxu0 0
  %704 = vmatprep.subr.bf16.mxu0 0
  %705 = vmatpush1.bf16.msra.mxu0 %v687
  %706 = vmatprep.subr.bf16.mxu0 0
  %707 = vmatpush1.bf16.msra.mxu0 %v686
  %708 = vmatprep.subr.bf16.mxu0 0
  %709 = vmatpush1.bf16.msra.mxu0 %v685
  %710 = vmatprep.subr.bf16.mxu0 0
  %711 = vmatpush1.bf16.msra.mxu0 %v684
  %712 = vmatprep.subr.bf16.mxu0 0
  %713 = vmatpush2.bf16.msra.mxu0 0
  %714 = vmatprep.subr.bf16.mxu0 0
  %715 = vmatpush2.bf16.msra.mxu0 0
  %716 = vmatprep.subr.bf16.mxu0 0
  %717 = vmatpush2.bf16.msra.mxu0 0
  %718 = vmatprep.subr.bf16.mxu0 0
  %719 = vmatpush2.bf16.msra.mxu0 0
  %720 = vmatprep.subr.bf16.mxu0 0
  %721 = vmatpush2.bf16.msra.mxu0 0
  %722 = vmatprep.subr.bf16.mxu0 0
  %723 = vmatpush2.bf16.msra.mxu0 0
  %724 = vmatprep.subr.bf16.mxu0 0
  %725 = vmatpush2.bf16.msra.mxu0 0
  %726 = vmatprep.subr.bf16.mxu0 0
  %727 = vmatpush2.bf16.msra.mxu0 0
  %728 = vmatprep.mubr.bf16.mxu0 0
  %729 = vmatmul.mubr.bf16.gmra.mxu0 %v694
  %v730 = vpop.f32.mrf.mxu0
  %v731 = vadd.f32 %v666, %v730
  %v732 = vpop.f32.mrf.mxu0
  %v733 = vpop.f32.mrf.mxu0
  %v734 = vadd.f32 %v666, %v733
  %v735 = vpop.f32.mrf.mxu0
  %736 = vdwg.mxu0
  %v737 = vld [vmem:[%s12] sm:$0x3]
  %v738 = vadd.f32 %v731, %v576
  %v739 = vadd.f32 %v734, %v577
  %v740 = vsel %vm57, %v738, 0.0
  %741 = vadd.xlane.f32.xlu0 %v740
  %v742 = vpop.xlane.xlu0 %741
  %v743 = vsel %vm57, %v739, 0.0
  %744 = vadd.xlane.f32.xlu0 %v743
  %v745 = vpop.xlane.xlu0 %744
  %v746 = vmul.f32 %v742, %v64
  %v747 = vmul.f32 %v745, %v64
  %v748 = vsub.f32 %v738, %v746
  %v749 = vsub.f32 %v739, %v747
  %v750 = vmul.f32 %v748, %v748
  %v751 = vmul.f32 %v749, %v749
  %v752 = vsel %vm57, %v750, 0.0
  %753 = vadd.xlane.f32.xlu0 %v752
  %v754 = vpop.xlane.xlu0 %753
  %v755 = vsel %vm57, %v751, 0.0
  %756 = vadd.xlane.f32.xlu0 %v755
  %v757 = vpop.xlane.xlu0 %756
  %v758 = vmul.f32 %v754, %v64
  %v759 = vmul.f32 %v757, %v64
  %v760 = vadd.f32 %v758, 1e-12
  %v761 = vadd.f32 %v759, 1e-12
  %v762 = vrsqrt.pop %v760
  %v763 = vrsqrt.pop %v761
  %v764 = vmul.f32 %v748, %v762
  %v765 = vmul.f32 %v749, %v763
  %v766 = vlaneseq
  %v767 = vshrl.u32 %v766, 7
  %v768 = vsub.s32 0, %v767
  %v769 = vrot.slane %v737, %v768
  %v770 = vmul.f32 %v764, %v769
  %v771 = vmul.f32 %v765, %v769
  %v772 = vlaneseq
  %v773 = vshrl.u32 %v772, 7
  %v774 = vsub.s32 1, %v773
  %v775 = vrot.slane %v737, %v774
  %v776 = vadd.f32 %v770, %v775
  %v777 = vadd.f32 %v771, %v775
  %s778 = scalar_lea.vmem %s3, 16
  %v779 = vld [vmem:[%s778] sm:$0xf]
  %v780 = vld [vmem:[%s778 + $0x4] sm:$0xf]
  %v781 = vld [vmem:[%s778 + $0x8] sm:$0xf]
  %v782 = vld [vmem:[%s778 + $0xc] sm:$0xf]
  %s783 = scalar_lea.vmem %s5, 16
  %v784 = vld [vmem:[%s783] sm:$0xf]
  %v785 = vld [vmem:[%s783 + $0x4] sm:$0xf]
  %v786 = vld [vmem:[%s783 + $0x8] sm:$0xf]
  %v787 = vld [vmem:[%s783 + $0xc] sm:$0xf]
  %s788 = scalar_lea.vmem %s8, 16
  %v789 = vld [vmem:[%s788] sm:$0xf]
  %v790 = vld [vmem:[%s788 + $0x4] sm:$0xf]
  %v791 = vld [vmem:[%s788 + $0x8] sm:$0xf]
  %v792 = vld [vmem:[%s788 + $0xc] sm:$0xf]
  %s793 = scalar_lea.vmem %s10, 32
  %v794 = vld [vmem:[%s793] sm:$0xf]
  %v795 = vld [vmem:[%s793 + $0x4] sm:$0xf]
  %v796 = vld [vmem:[%s793 + $0x8] sm:$0xf]
  %v797 = vld [vmem:[%s793 + $0xc] sm:$0xf]
  %v798 = vld [vmem:[%s793 + $0x10] sm:$0xf]
  %v799 = vld [vmem:[%s793 + $0x14] sm:$0xf]
  %v800 = vld [vmem:[%s793 + $0x18] sm:$0xf]
  %v801 = vld [vmem:[%s793 + $0x1c] sm:$0xf]
  %v802 = vpack.c.bf16 %v777, %v776
  %s803 = scalar_lea.vmem %s4, 1
  %v804 = vld [vmem:[%s803] sm:$0x1]
  %v806 = vlaneseq
  %v807 = vshrl.u32 %v806, 7
  %v808 = vsub.s32 0, %v807
  %v809 = vrot.slane %v804, %v808
  %v815 = vunpack.c.l.b16 %v779
  %v816 = vunpack.c.l.b16 %v780
  %v817 = vunpack.c.l.b16 %v781
  %v818 = vunpack.c.l.b16 %v782
  %v819 = vpack.c.b16 %v816, %v815
  %v820 = vpack.c.b16 %v818, %v817
  %v824 = vsel %vm57, %v802, 0
  %826 = vmatprep.subr.bf16.mxu0 0
  %827 = vmatpush1.bf16.msra.mxu0 0
  %828 = vmatprep.subr.bf16.mxu0 0
  %829 = vmatpush1.bf16.msra.mxu0 0
  %830 = vmatprep.subr.bf16.mxu0 0
  %831 = vmatpush1.bf16.msra.mxu0 0
  %832 = vmatprep.subr.bf16.mxu0 0
  %833 = vmatpush1.bf16.msra.mxu0 0
  %834 = vmatprep.subr.bf16.mxu0 0
  %835 = vmatpush1.bf16.msra.mxu0 0
  %836 = vmatprep.subr.bf16.mxu0 0
  %837 = vmatpush1.bf16.msra.mxu0 0
  %838 = vmatprep.subr.bf16.mxu0 0
  %839 = vmatpush1.bf16.msra.mxu0 %v820
  %840 = vmatprep.subr.bf16.mxu0 0
  %841 = vmatpush1.bf16.msra.mxu0 %v819
  %842 = vmatprep.subr.bf16.mxu0 0
  %843 = vmatpush2.bf16.msra.mxu0 0
  %844 = vmatprep.subr.bf16.mxu0 0
  %845 = vmatpush2.bf16.msra.mxu0 0
  %846 = vmatprep.subr.bf16.mxu0 0
  %847 = vmatpush2.bf16.msra.mxu0 0
  %848 = vmatprep.subr.bf16.mxu0 0
  %849 = vmatpush2.bf16.msra.mxu0 0
  %850 = vmatprep.subr.bf16.mxu0 0
  %851 = vmatpush2.bf16.msra.mxu0 0
  %852 = vmatprep.subr.bf16.mxu0 0
  %853 = vmatpush2.bf16.msra.mxu0 0
  %854 = vmatprep.subr.bf16.mxu0 0
  %855 = vmatpush2.bf16.msra.mxu0 0
  %856 = vmatprep.subr.bf16.mxu0 0
  %857 = vmatpush2.bf16.msra.mxu0 0
  %858 = vmatprep.mubr.bf16.mxu0 0
  %859 = vmatmul.mubr.bf16.gmra.mxu0 %v824
  %v860 = vpop.f32.mrf.mxu0
  %v861 = vadd.f32 %v809, %v860
  %v862 = vpop.f32.mrf.mxu0
  %v863 = vpop.f32.mrf.mxu0
  %v864 = vadd.f32 %v809, %v863
  %v865 = vpop.f32.mrf.mxu0
  %866 = vdwg.mxu0
  %v867 = vpack.c.bf16 %v864, %v861
  %869 = vrot.lane.b32.xlu0 %v867, 96
  %v870 = vpop.permute.xlu0 %869
  %v872 = vsel %vm187, %v867, 0
  %v875 = vsel %vm187, %v870, 0
  %877 = vmatprep.subr.bf16.mxu0 0
  %878 = vmatpush1.bf16.xpose.msra.mxu0 0
  %879 = vmatprep.subr.bf16.mxu0 0
  %880 = vmatpush1.bf16.xpose.msra.mxu0 0
  %881 = vmatprep.subr.bf16.mxu0 0
  %882 = vmatpush1.bf16.xpose.msra.mxu0 0
  %883 = vmatprep.subr.bf16.mxu0 0
  %884 = vmatpush1.bf16.xpose.msra.mxu0 0
  %885 = vmatprep.subr.bf16.mxu0 0
  %886 = vmatpush1.bf16.xpose.msra.mxu0 0
  %887 = vmatprep.subr.bf16.mxu0 0
  %888 = vmatpush1.bf16.xpose.msra.mxu0 0
  %889 = vmatprep.subr.bf16.mxu0 0
  %890 = vmatpush1.bf16.xpose.msra.mxu0 0
  %891 = vmatprep.subr.bf16.mxu0 0
  %892 = vmatpush1.bf16.xpose.msra.mxu0 %v875
  %893 = vmatprep.subr.bf16.mxu0 0
  %894 = vmatpush2.bf16.xpose.msra.mxu0 0
  %895 = vmatprep.subr.bf16.mxu0 0
  %896 = vmatpush2.bf16.xpose.msra.mxu0 0
  %897 = vmatprep.subr.bf16.mxu0 0
  %898 = vmatpush2.bf16.xpose.msra.mxu0 0
  %899 = vmatprep.subr.bf16.mxu0 0
  %900 = vmatpush2.bf16.xpose.msra.mxu0 0
  %901 = vmatprep.subr.bf16.mxu0 0
  %902 = vmatpush2.bf16.xpose.msra.mxu0 0
  %903 = vmatprep.subr.bf16.mxu0 0
  %904 = vmatpush2.bf16.xpose.msra.mxu0 0
  %905 = vmatprep.subr.bf16.mxu0 0
  %906 = vmatpush2.bf16.xpose.msra.mxu0 0
  %907 = vmatprep.subr.bf16.mxu0 0
  %908 = vmatpush2.bf16.xpose.msra.mxu0 0
  %909 = vmatprep.mubr.bf16.mxu0 0
  %910 = vmatmul.mubr.bf16.gmra.mxu0 %v872
  %v911 = vpop.f32.mrf.mxu0
  %v912 = vadd.f32 %v97, %v911
  %v913 = vpop.f32.mrf.mxu0
  %v914 = vpop.f32.mrf.mxu0
  %v915 = vadd.f32 %v98, %v914
  %v916 = vpop.f32.mrf.mxu0
  %917 = vdwg.mxu0
  %v918 = vsel %vm187, %v912, -inf
  %919 = vmax.xlane.f32.xlu0 %v918
  %v920 = vpop.xlane.xlu0 %919
  %v921 = vsel %vm187, %v915, -inf
  %922 = vmax.xlane.f32.xlu0 %v921
  %v923 = vpop.xlane.xlu0 %922
  %v924 = vsub.f32 %v912, %v920
  %v925 = vsub.f32 %v915, %v923
  %v926 = vmul.f32 %v924, 1.442695
  %v927 = vpow.pop %v926
  %v928 = vmul.f32 %v925, 1.442695
  %v929 = vpow.pop %v928
  %v930 = vsel %vm187, %v927, 0.0
  %931 = vadd.xlane.f32.xlu0 %v930
  %v932 = vpop.xlane.xlu0 %931
  %v933 = vsel %vm187, %v929, 0.0
  %934 = vadd.xlane.f32.xlu0 %v933
  %v935 = vpop.xlane.xlu0 %934
  %v936 = vrcp.pop %v932
  %v937 = vrcp.pop %v935
  %v938 = vmul.f32 %v927, %v936
  %v939 = vmul.f32 %v929, %v937
  %v940 = vpack.c.bf16 %v939, %v938
  %941 = vrot.lane.b32.xlu0 %v867, 64
  %v942 = vpop.permute.xlu0 %941
  %v945 = vsel %vm187, %v940, 0
  %947 = vmatprep.subr.bf16.mxu0 0
  %948 = vmatpush1.bf16.msra.mxu0 0
  %949 = vmatprep.subr.bf16.mxu0 0
  %950 = vmatpush1.bf16.msra.mxu0 0
  %951 = vmatprep.subr.bf16.mxu0 0
  %952 = vmatpush1.bf16.msra.mxu0 0
  %953 = vmatprep.subr.bf16.mxu0 0
  %954 = vmatpush1.bf16.msra.mxu0 0
  %955 = vmatprep.subr.bf16.mxu0 0
  %956 = vmatpush1.bf16.msra.mxu0 0
  %957 = vmatprep.subr.bf16.mxu0 0
  %958 = vmatpush1.bf16.msra.mxu0 0
  %959 = vmatprep.subr.bf16.mxu0 0
  %960 = vmatpush1.bf16.msra.mxu0 0
  %961 = vmatprep.subr.bf16.mxu0 0
  %962 = vmatpush1.bf16.msra.mxu0 %v942
  %963 = vmatprep.subr.bf16.mxu0 0
  %964 = vmatpush2.bf16.msra.mxu0 0
  %965 = vmatprep.subr.bf16.mxu0 0
  %966 = vmatpush2.bf16.msra.mxu0 0
  %967 = vmatprep.subr.bf16.mxu0 0
  %968 = vmatpush2.bf16.msra.mxu0 0
  %969 = vmatprep.subr.bf16.mxu0 0
  %970 = vmatpush2.bf16.msra.mxu0 0
  %971 = vmatprep.subr.bf16.mxu0 0
  %972 = vmatpush2.bf16.msra.mxu0 0
  %973 = vmatprep.subr.bf16.mxu0 0
  %974 = vmatpush2.bf16.msra.mxu0 0
  %975 = vmatprep.subr.bf16.mxu0 0
  %976 = vmatpush2.bf16.msra.mxu0 0
  %977 = vmatprep.subr.bf16.mxu0 0
  %978 = vmatpush2.bf16.msra.mxu0 0
  %979 = vmatprep.mubr.bf16.mxu0 0
  %980 = vmatmul.mubr.bf16.gmra.mxu0 %v945
  %v981 = vpop.f32.mrf.mxu0
  %v982 = vadd.f32 0.0, %v981
  %v983 = vpop.f32.mrf.mxu0
  %v984 = vpop.f32.mrf.mxu0
  %v985 = vadd.f32 0.0, %v984
  %v986 = vpop.f32.mrf.mxu0
  %987 = vdwg.mxu0
  %v988 = vpack.c.bf16 %v985, %v982
  %989 = vrot.lane.b32.xlu0 %v867, 112
  %v990 = vpop.permute.xlu0 %989
  %991 = vrot.lane.b32.xlu0 %v867, 80
  %v992 = vpop.permute.xlu0 %991
  %v994 = vsel %vm187, %v990, 0
  %v997 = vsel %vm187, %v992, 0
  %999 = vmatprep.subr.bf16.mxu0 0
  %1000 = vmatpush1.bf16.xpose.msra.mxu0 0
  %1001 = vmatprep.subr.bf16.mxu0 0
  %1002 = vmatpush1.bf16.xpose.msra.mxu0 0
  %1003 = vmatprep.subr.bf16.mxu0 0
  %1004 = vmatpush1.bf16.xpose.msra.mxu0 0
  %1005 = vmatprep.subr.bf16.mxu0 0
  %1006 = vmatpush1.bf16.xpose.msra.mxu0 0
  %1007 = vmatprep.subr.bf16.mxu0 0
  %1008 = vmatpush1.bf16.xpose.msra.mxu0 0
  %1009 = vmatprep.subr.bf16.mxu0 0
  %1010 = vmatpush1.bf16.xpose.msra.mxu0 0
  %1011 = vmatprep.subr.bf16.mxu0 0
  %1012 = vmatpush1.bf16.xpose.msra.mxu0 0
  %1013 = vmatprep.subr.bf16.mxu0 0
  %1014 = vmatpush1.bf16.xpose.msra.mxu0 %v997
  %1015 = vmatprep.subr.bf16.mxu0 0
  %1016 = vmatpush2.bf16.xpose.msra.mxu0 0
  %1017 = vmatprep.subr.bf16.mxu0 0
  %1018 = vmatpush2.bf16.xpose.msra.mxu0 0
  %1019 = vmatprep.subr.bf16.mxu0 0
  %1020 = vmatpush2.bf16.xpose.msra.mxu0 0
  %1021 = vmatprep.subr.bf16.mxu0 0
  %1022 = vmatpush2.bf16.xpose.msra.mxu0 0
  %1023 = vmatprep.subr.bf16.mxu0 0
  %1024 = vmatpush2.bf16.xpose.msra.mxu0 0
  %1025 = vmatprep.subr.bf16.mxu0 0
  %1026 = vmatpush2.bf16.xpose.msra.mxu0 0
  %1027 = vmatprep.subr.bf16.mxu0 0
  %1028 = vmatpush2.bf16.xpose.msra.mxu0 0
  %1029 = vmatprep.subr.bf16.mxu0 0
  %1030 = vmatpush2.bf16.xpose.msra.mxu0 0
  %1031 = vmatprep.mubr.bf16.mxu0 0
  %1032 = vmatmul.mubr.bf16.gmra.mxu0 %v994
  %v1033 = vpop.f32.mrf.mxu0
  %v1034 = vadd.f32 %v97, %v1033
  %v1035 = vpop.f32.mrf.mxu0
  %v1036 = vpop.f32.mrf.mxu0
  %v1037 = vadd.f32 %v98, %v1036
  %v1038 = vpop.f32.mrf.mxu0
  %1039 = vdwg.mxu0
  %v1040 = vsel %vm187, %v1034, -inf
  %1041 = vmax.xlane.f32.xlu0 %v1040
  %v1042 = vpop.xlane.xlu0 %1041
  %v1043 = vsel %vm187, %v1037, -inf
  %1044 = vmax.xlane.f32.xlu0 %v1043
  %v1045 = vpop.xlane.xlu0 %1044
  %v1046 = vsub.f32 %v1034, %v1042
  %v1047 = vsub.f32 %v1037, %v1045
  %v1048 = vmul.f32 %v1046, 1.442695
  %v1049 = vpow.pop %v1048
  %v1050 = vmul.f32 %v1047, 1.442695
  %v1051 = vpow.pop %v1050
  %v1052 = vsel %vm187, %v1049, 0.0
  %1053 = vadd.xlane.f32.xlu0 %v1052
  %v1054 = vpop.xlane.xlu0 %1053
  %v1055 = vsel %vm187, %v1051, 0.0
  %1056 = vadd.xlane.f32.xlu0 %v1055
  %v1057 = vpop.xlane.xlu0 %1056
  %v1058 = vrcp.pop %v1054
  %v1059 = vrcp.pop %v1057
  %v1060 = vmul.f32 %v1049, %v1058
  %v1061 = vmul.f32 %v1051, %v1059
  %v1062 = vpack.c.bf16 %v1061, %v1060
  %1063 = vrot.lane.b32.xlu0 %v867, 48
  %v1064 = vpop.permute.xlu0 %1063
  %v1067 = vsel %vm187, %v1062, 0
  %1069 = vmatprep.subr.bf16.mxu0 0
  %1070 = vmatpush1.bf16.msra.mxu0 0
  %1071 = vmatprep.subr.bf16.mxu0 0
  %1072 = vmatpush1.bf16.msra.mxu0 0
  %1073 = vmatprep.subr.bf16.mxu0 0
  %1074 = vmatpush1.bf16.msra.mxu0 0
  %1075 = vmatprep.subr.bf16.mxu0 0
  %1076 = vmatpush1.bf16.msra.mxu0 0
  %1077 = vmatprep.subr.bf16.mxu0 0
  %1078 = vmatpush1.bf16.msra.mxu0 0
  %1079 = vmatprep.subr.bf16.mxu0 0
  %1080 = vmatpush1.bf16.msra.mxu0 0
  %1081 = vmatprep.subr.bf16.mxu0 0
  %1082 = vmatpush1.bf16.msra.mxu0 0
  %1083 = vmatprep.subr.bf16.mxu0 0
  %1084 = vmatpush1.bf16.msra.mxu0 %v1064
  %1085 = vmatprep.subr.bf16.mxu0 0
  %1086 = vmatpush2.bf16.msra.mxu0 0
  %1087 = vmatprep.subr.bf16.mxu0 0
  %1088 = vmatpush2.bf16.msra.mxu0 0
  %1089 = vmatprep.subr.bf16.mxu0 0
  %1090 = vmatpush2.bf16.msra.mxu0 0
  %1091 = vmatprep.subr.bf16.mxu0 0
  %1092 = vmatpush2.bf16.msra.mxu0 0
  %1093 = vmatprep.subr.bf16.mxu0 0
  %1094 = vmatpush2.bf16.msra.mxu0 0
  %1095 = vmatprep.subr.bf16.mxu0 0
  %1096 = vmatpush2.bf16.msra.mxu0 0
  %1097 = vmatprep.subr.bf16.mxu0 0
  %1098 = vmatpush2.bf16.msra.mxu0 0
  %1099 = vmatprep.subr.bf16.mxu0 0
  %1100 = vmatpush2.bf16.msra.mxu0 0
  %1101 = vmatprep.mubr.bf16.mxu0 0
  %1102 = vmatmul.mubr.bf16.gmra.mxu0 %v1067
  %v1103 = vpop.f32.mrf.mxu0
  %v1104 = vadd.f32 0.0, %v1103
  %v1105 = vpop.f32.mrf.mxu0
  %v1106 = vpop.f32.mrf.mxu0
  %v1107 = vadd.f32 0.0, %v1106
  %v1108 = vpop.f32.mrf.mxu0
  %1109 = vdwg.mxu0
  %v1110 = vpack.c.bf16 %v1107, %v1104
  %v1113 = vunpack.c.l.b16 %v786
  %v1114 = vunpack.c.l.b16 %v787
  %v1115 = vpack.c.b16 %v1114, %v1113
  %v1118 = vsel %vm187, %v1110, 0
  %1120 = vmatprep.subr.bf16.mxu0 0
  %1121 = vmatpush1.bf16.msra.mxu0 0
  %1122 = vmatprep.subr.bf16.mxu0 0
  %1123 = vmatpush1.bf16.msra.mxu0 0
  %1124 = vmatprep.subr.bf16.mxu0 0
  %1125 = vmatpush1.bf16.msra.mxu0 0
  %1126 = vmatprep.subr.bf16.mxu0 0
  %1127 = vmatpush1.bf16.msra.mxu0 0
  %1128 = vmatprep.subr.bf16.mxu0 0
  %1129 = vmatpush1.bf16.msra.mxu0 0
  %1130 = vmatprep.subr.bf16.mxu0 0
  %1131 = vmatpush1.bf16.msra.mxu0 0
  %1132 = vmatprep.subr.bf16.mxu0 0
  %1133 = vmatpush1.bf16.msra.mxu0 0
  %1134 = vmatprep.subr.bf16.mxu0 0
  %1135 = vmatpush1.bf16.msra.mxu0 %v1115
  %1136 = vmatprep.subr.bf16.mxu0 0
  %1137 = vmatpush2.bf16.msra.mxu0 0
  %1138 = vmatprep.subr.bf16.mxu0 0
  %1139 = vmatpush2.bf16.msra.mxu0 0
  %1140 = vmatprep.subr.bf16.mxu0 0
  %1141 = vmatpush2.bf16.msra.mxu0 0
  %1142 = vmatprep.subr.bf16.mxu0 0
  %1143 = vmatpush2.bf16.msra.mxu0 0
  %1144 = vmatprep.subr.bf16.mxu0 0
  %1145 = vmatpush2.bf16.msra.mxu0 0
  %1146 = vmatprep.subr.bf16.mxu0 0
  %1147 = vmatpush2.bf16.msra.mxu0 0
  %1148 = vmatprep.subr.bf16.mxu0 0
  %1149 = vmatpush2.bf16.msra.mxu0 0
  %1150 = vmatprep.subr.bf16.mxu0 0
  %1151 = vmatpush2.bf16.msra.mxu0 0
  %1152 = vmatprep.mubr.bf16.mxu0 0
  %1153 = vmatmul.mubr.bf16.gmra.mxu0 %v1118
  %v1154 = vpop.f32.mrf.mxu0
  %v1155 = vadd.f32 0.0, %v1154
  %v1156 = vpop.f32.mrf.mxu0
  %v1157 = vpop.f32.mrf.mxu0
  %v1158 = vadd.f32 0.0, %v1157
  %v1159 = vpop.f32.mrf.mxu0
  %1160 = vdwg.mxu0
  %v1163 = vunpack.c.l.b16 %v784
  %v1164 = vunpack.c.l.b16 %v785
  %v1165 = vpack.c.b16 %v1164, %v1163
  %v1168 = vsel %vm187, %v988, 0
  %1170 = vmatprep.subr.bf16.mxu0 0
  %1171 = vmatpush1.bf16.msra.mxu0 0
  %1172 = vmatprep.subr.bf16.mxu0 0
  %1173 = vmatpush1.bf16.msra.mxu0 0
  %1174 = vmatprep.subr.bf16.mxu0 0
  %1175 = vmatpush1.bf16.msra.mxu0 0
  %1176 = vmatprep.subr.bf16.mxu0 0
  %1177 = vmatpush1.bf16.msra.mxu0 0
  %1178 = vmatprep.subr.bf16.mxu0 0
  %1179 = vmatpush1.bf16.msra.mxu0 0
  %1180 = vmatprep.subr.bf16.mxu0 0
  %1181 = vmatpush1.bf16.msra.mxu0 0
  %1182 = vmatprep.subr.bf16.mxu0 0
  %1183 = vmatpush1.bf16.msra.mxu0 0
  %1184 = vmatprep.subr.bf16.mxu0 0
  %1185 = vmatpush1.bf16.msra.mxu0 %v1165
  %1186 = vmatprep.subr.bf16.mxu0 0
  %1187 = vmatpush2.bf16.msra.mxu0 0
  %1188 = vmatprep.subr.bf16.mxu0 0
  %1189 = vmatpush2.bf16.msra.mxu0 0
  %1190 = vmatprep.subr.bf16.mxu0 0
  %1191 = vmatpush2.bf16.msra.mxu0 0
  %1192 = vmatprep.subr.bf16.mxu0 0
  %1193 = vmatpush2.bf16.msra.mxu0 0
  %1194 = vmatprep.subr.bf16.mxu0 0
  %1195 = vmatpush2.bf16.msra.mxu0 0
  %1196 = vmatprep.subr.bf16.mxu0 0
  %1197 = vmatpush2.bf16.msra.mxu0 0
  %1198 = vmatprep.subr.bf16.mxu0 0
  %1199 = vmatpush2.bf16.msra.mxu0 0
  %1200 = vmatprep.subr.bf16.mxu0 0
  %1201 = vmatpush2.bf16.msra.mxu0 0
  %1202 = vmatprep.mubr.bf16.mxu0 0
  %1203 = vmatmul.mubr.bf16.gmra.mxu0 %v1168
  %v1204 = vpop.f32.mrf.mxu0
  %v1205 = vadd.f32 %v1155, %v1204
  %v1206 = vpop.f32.mrf.mxu0
  %v1207 = vpop.f32.mrf.mxu0
  %v1208 = vadd.f32 %v1158, %v1207
  %v1209 = vpop.f32.mrf.mxu0
  %1210 = vdwg.mxu0
  %s1211 = scalar_lea.vmem %s6, 1
  %v1212 = vld [vmem:[%s1211] sm:$0x1]
  %v1214 = vlaneseq
  %v1215 = vshrl.u32 %v1214, 7
  %v1216 = vsub.s32 0, %v1215
  %v1217 = vrot.slane %v1212, %v1216
  %v1219 = vadd.f32 %v1205, %v1217
  %v1220 = vadd.f32 %v1208, %v1217
  %s1221 = scalar_lea.vmem %s7, 2
  %v1222 = vld [vmem:[%s1221] sm:$0x3]
  %v1223 = vadd.f32 %v1219, %v776
  %v1224 = vadd.f32 %v1220, %v777
  %v1225 = vsel %vm57, %v1223, 0.0
  %1226 = vadd.xlane.f32.xlu0 %v1225
  %v1227 = vpop.xlane.xlu0 %1226
  %v1228 = vsel %vm57, %v1224, 0.0
  %1229 = vadd.xlane.f32.xlu0 %v1228
  %v1230 = vpop.xlane.xlu0 %1229
  %v1231 = vmul.f32 %v1227, %v64
  %v1232 = vmul.f32 %v1230, %v64
  %v1233 = vsub.f32 %v1223, %v1231
  %v1234 = vsub.f32 %v1224, %v1232
  %v1235 = vmul.f32 %v1233, %v1233
  %v1236 = vmul.f32 %v1234, %v1234
  %v1237 = vsel %vm57, %v1235, 0.0
  %1238 = vadd.xlane.f32.xlu0 %v1237
  %v1239 = vpop.xlane.xlu0 %1238
  %v1240 = vsel %vm57, %v1236, 0.0
  %1241 = vadd.xlane.f32.xlu0 %v1240
  %v1242 = vpop.xlane.xlu0 %1241
  %v1243 = vmul.f32 %v1239, %v64
  %v1244 = vmul.f32 %v1242, %v64
  %v1245 = vadd.f32 %v1243, 1e-12
  %v1246 = vadd.f32 %v1244, 1e-12
  %v1247 = vrsqrt.pop %v1245
  %v1248 = vrsqrt.pop %v1246
  %v1249 = vmul.f32 %v1233, %v1247
  %v1250 = vmul.f32 %v1234, %v1248
  %v1251 = vlaneseq
  %v1252 = vshrl.u32 %v1251, 7
  %v1253 = vsub.s32 0, %v1252
  %v1254 = vrot.slane %v1222, %v1253
  %v1255 = vmul.f32 %v1249, %v1254
  %v1256 = vmul.f32 %v1250, %v1254
  %v1257 = vlaneseq
  %v1258 = vshrl.u32 %v1257, 7
  %v1259 = vsub.s32 1, %v1258
  %v1260 = vrot.slane %v1222, %v1259
  %v1261 = vadd.f32 %v1255, %v1260
  %v1262 = vadd.f32 %v1256, %v1260
  %v1263 = vpack.c.bf16 %v1262, %v1261
  %s1264 = scalar_lea.vmem %s9, 1
  %v1265 = vld [vmem:[%s1264] sm:$0x1]
  %v1267 = vlaneseq
  %v1268 = vshrl.u32 %v1267, 7
  %v1269 = vsub.s32 0, %v1268
  %v1270 = vrot.slane %v1265, %v1269
  %v1276 = vunpack.c.l.b16 %v789
  %v1277 = vunpack.c.l.b16 %v790
  %v1278 = vunpack.c.l.b16 %v791
  %v1279 = vunpack.c.l.b16 %v792
  %v1280 = vpack.c.b16 %v1277, %v1276
  %v1281 = vpack.c.b16 %v1279, %v1278
  %v1285 = vsel %vm57, %v1263, 0
  %1287 = vmatprep.subr.bf16.mxu0 0
  %1288 = vmatpush1.bf16.msra.mxu0 0
  %1289 = vmatprep.subr.bf16.mxu0 0
  %1290 = vmatpush1.bf16.msra.mxu0 0
  %1291 = vmatprep.subr.bf16.mxu0 0
  %1292 = vmatpush1.bf16.msra.mxu0 0
  %1293 = vmatprep.subr.bf16.mxu0 0
  %1294 = vmatpush1.bf16.msra.mxu0 0
  %1295 = vmatprep.subr.bf16.mxu0 0
  %1296 = vmatpush1.bf16.msra.mxu0 0
  %1297 = vmatprep.subr.bf16.mxu0 0
  %1298 = vmatpush1.bf16.msra.mxu0 0
  %1299 = vmatprep.subr.bf16.mxu0 0
  %1300 = vmatpush1.bf16.msra.mxu0 %v1281
  %1301 = vmatprep.subr.bf16.mxu0 0
  %1302 = vmatpush1.bf16.msra.mxu0 %v1280
  %1303 = vmatprep.subr.bf16.mxu0 0
  %1304 = vmatpush2.bf16.msra.mxu0 0
  %1305 = vmatprep.subr.bf16.mxu0 0
  %1306 = vmatpush2.bf16.msra.mxu0 0
  %1307 = vmatprep.subr.bf16.mxu0 0
  %1308 = vmatpush2.bf16.msra.mxu0 0
  %1309 = vmatprep.subr.bf16.mxu0 0
  %1310 = vmatpush2.bf16.msra.mxu0 0
  %1311 = vmatprep.subr.bf16.mxu0 0
  %1312 = vmatpush2.bf16.msra.mxu0 0
  %1313 = vmatprep.subr.bf16.mxu0 0
  %1314 = vmatpush2.bf16.msra.mxu0 0
  %1315 = vmatprep.subr.bf16.mxu0 0
  %1316 = vmatpush2.bf16.msra.mxu0 0
  %1317 = vmatprep.subr.bf16.mxu0 0
  %1318 = vmatpush2.bf16.msra.mxu0 0
  %1319 = vmatprep.mubr.bf16.mxu0 0
  %1320 = vmatmul.mubr.bf16.gmra.mxu0 %v1285
  %v1321 = vpop.f32.mrf.mxu0
  %v1322 = vadd.f32 %v1270, %v1321
  %v1323 = vpop.f32.mrf.mxu0
  %v1324 = vpop.f32.mrf.mxu0
  %v1325 = vadd.f32 %v1270, %v1324
  %v1326 = vpop.f32.mrf.mxu0
  %1327 = vdwg.mxu0
  %v1328 = vmul.f32 %v1322, %v1322
  %v1329 = vmul.f32 %v1325, %v1325
  %v1330 = vmul.f32 %v1322, %v1328
  %v1331 = vmul.f32 %v1325, %v1329
  %v1332 = vmul.f32 %v1330, 0.044715
  %v1333 = vmul.f32 %v1331, 0.044715
  %v1334 = vadd.f32 %v1322, %v1332
  %v1335 = vadd.f32 %v1325, %v1333
  %v1336 = vmul.f32 %v1334, 0.7978846
  %v1337 = vmul.f32 %v1335, 0.7978846
  %v1338 = vtanh.pop %v1336
  %v1339 = vtanh.pop %v1337
  %v1340 = vadd.f32 %v1338, 1.0
  %v1341 = vadd.f32 %v1339, 1.0
  %v1342 = vmul.f32 %v1340, 0.5
  %v1343 = vmul.f32 %v1341, 0.5
  %v1344 = vmul.f32 %v1322, %v1342
  %v1345 = vmul.f32 %v1325, %v1343
  %v1346 = vpack.c.bf16 %v1345, %v1344
  %s1347 = scalar_lea.vmem %s11, 1
  %v1348 = vld [vmem:[%s1347] sm:$0x1]
  %v1350 = vlaneseq
  %v1351 = vshrl.u32 %v1350, 7
  %v1352 = vsub.s32 0, %v1351
  %v1353 = vrot.slane %v1348, %v1352
  %v1363 = vunpack.c.l.b16 %v794
  %v1364 = vunpack.c.l.b16 %v795
  %v1365 = vunpack.c.l.b16 %v796
  %v1366 = vunpack.c.l.b16 %v797
  %v1367 = vunpack.c.l.b16 %v798
  %v1368 = vunpack.c.l.b16 %v799
  %v1369 = vunpack.c.l.b16 %v800
  %v1370 = vunpack.c.l.b16 %v801
  %v1371 = vpack.c.b16 %v1364, %v1363
  %v1372 = vpack.c.b16 %v1366, %v1365
  %v1373 = vpack.c.b16 %v1368, %v1367
  %v1374 = vpack.c.b16 %v1370, %v1369
  %v1380 = vsel %vm692, %v1346, 0
  %1382 = vmatprep.subr.bf16.mxu0 0
  %1383 = vmatpush1.bf16.msra.mxu0 0
  %1384 = vmatprep.subr.bf16.mxu0 0
  %1385 = vmatpush1.bf16.msra.mxu0 0
  %1386 = vmatprep.subr.bf16.mxu0 0
  %1387 = vmatpush1.bf16.msra.mxu0 0
  %1388 = vmatprep.subr.bf16.mxu0 0
  %1389 = vmatpush1.bf16.msra.mxu0 0
  %1390 = vmatprep.subr.bf16.mxu0 0
  %1391 = vmatpush1.bf16.msra.mxu0 %v1374
  %1392 = vmatprep.subr.bf16.mxu0 0
  %1393 = vmatpush1.bf16.msra.mxu0 %v1373
  %1394 = vmatprep.subr.bf16.mxu0 0
  %1395 = vmatpush1.bf16.msra.mxu0 %v1372
  %1396 = vmatprep.subr.bf16.mxu0 0
  %1397 = vmatpush1.bf16.msra.mxu0 %v1371
  %1398 = vmatprep.subr.bf16.mxu0 0
  %1399 = vmatpush2.bf16.msra.mxu0 0
  %1400 = vmatprep.subr.bf16.mxu0 0
  %1401 = vmatpush2.bf16.msra.mxu0 0
  %1402 = vmatprep.subr.bf16.mxu0 0
  %1403 = vmatpush2.bf16.msra.mxu0 0
  %1404 = vmatprep.subr.bf16.mxu0 0
  %1405 = vmatpush2.bf16.msra.mxu0 0
  %1406 = vmatprep.subr.bf16.mxu0 0
  %1407 = vmatpush2.bf16.msra.mxu0 0
  %1408 = vmatprep.subr.bf16.mxu0 0
  %1409 = vmatpush2.bf16.msra.mxu0 0
  %1410 = vmatprep.subr.bf16.mxu0 0
  %1411 = vmatpush2.bf16.msra.mxu0 0
  %1412 = vmatprep.subr.bf16.mxu0 0
  %1413 = vmatpush2.bf16.msra.mxu0 0
  %1414 = vmatprep.mubr.bf16.mxu0 0
  %1415 = vmatmul.mubr.bf16.gmra.mxu0 %v1380
  %v1416 = vpop.f32.mrf.mxu0
  %v1417 = vadd.f32 %v1353, %v1416
  %v1418 = vpop.f32.mrf.mxu0
  %v1419 = vpop.f32.mrf.mxu0
  %v1420 = vadd.f32 %v1353, %v1419
  %v1421 = vpop.f32.mrf.mxu0
  %1422 = vdwg.mxu0
  %s1423 = scalar_lea.vmem %s12, 2
  %v1424 = vld [vmem:[%s1423] sm:$0x3]
  %v1425 = vadd.f32 %v1417, %v1261
  %v1426 = vadd.f32 %v1420, %v1262
  %v1427 = vsel %vm57, %v1425, 0.0
  %1428 = vadd.xlane.f32.xlu0 %v1427
  %v1429 = vpop.xlane.xlu0 %1428
  %v1430 = vsel %vm57, %v1426, 0.0
  %1431 = vadd.xlane.f32.xlu0 %v1430
  %v1432 = vpop.xlane.xlu0 %1431
  %v1433 = vmul.f32 %v1429, %v64
  %v1434 = vmul.f32 %v1432, %v64
  %v1435 = vsub.f32 %v1425, %v1433
  %v1436 = vsub.f32 %v1426, %v1434
  %v1437 = vmul.f32 %v1435, %v1435
  %v1438 = vmul.f32 %v1436, %v1436
  %v1439 = vsel %vm57, %v1437, 0.0
  %1440 = vadd.xlane.f32.xlu0 %v1439
  %v1441 = vpop.xlane.xlu0 %1440
  %v1442 = vsel %vm57, %v1438, 0.0
  %1443 = vadd.xlane.f32.xlu0 %v1442
  %v1444 = vpop.xlane.xlu0 %1443
  %v1445 = vmul.f32 %v1441, %v64
  %v1446 = vmul.f32 %v1444, %v64
  %v1447 = vadd.f32 %v1445, 1e-12
  %v1448 = vadd.f32 %v1446, 1e-12
  %v1449 = vrsqrt.pop %v1447
  %v1450 = vrsqrt.pop %v1448
  %v1451 = vmul.f32 %v1435, %v1449
  %v1452 = vmul.f32 %v1436, %v1450
  %v1453 = vlaneseq
  %v1454 = vshrl.u32 %v1453, 7
  %v1455 = vsub.s32 0, %v1454
  %v1456 = vrot.slane %v1424, %v1455
  %v1457 = vmul.f32 %v1451, %v1456
  %v1458 = vmul.f32 %v1452, %v1456
  %v1459 = vlaneseq
  %v1460 = vshrl.u32 %v1459, 7
  %v1461 = vsub.s32 1, %v1460
  %v1462 = vrot.slane %v1424, %v1461
  %v1463 = vadd.f32 %v1457, %v1462
  %v1464 = vadd.f32 %v1458, %v1462
  %v1465 = vpack.c.bf16 %v1464, %v1463
  %v1466 = vld [vmem:[%s13] sm:$0xf]
  %v1467 = vld [vmem:[%s13 + $0x4] sm:$0xf]
  %v1468 = vld [vmem:[%s13 + $0x8] sm:$0xf]
  %v1469 = vld [vmem:[%s13 + $0xc] sm:$0xf]
  %v1470 = vld [vmem:[#allocation2] sm:$0x1]
  %v1472 = vlaneseq
  %v1473 = vshrl.u32 %v1472, 7
  %v1474 = vsub.s32 0, %v1473
  %v1475 = vrot.slane %v1470, %v1474
  %v1481 = vunpack.c.l.b16 %v1466
  %v1482 = vunpack.c.l.b16 %v1467
  %v1483 = vunpack.c.l.b16 %v1468
  %v1484 = vunpack.c.l.b16 %v1469
  %v1485 = vpack.c.b16 %v1482, %v1481
  %v1486 = vpack.c.b16 %v1484, %v1483
  %v1490 = vsel %vm57, %v1465, 0
  %1492 = vmatprep.subr.bf16.mxu0 0
  %1493 = vmatpush1.bf16.msra.mxu0 0
  %1494 = vmatprep.subr.bf16.mxu0 0
  %1495 = vmatpush1.bf16.msra.mxu0 0
  %1496 = vmatprep.subr.bf16.mxu0 0
  %1497 = vmatpush1.bf16.msra.mxu0 0
  %1498 = vmatprep.subr.bf16.mxu0 0
  %1499 = vmatpush1.bf16.msra.mxu0 0
  %1500 = vmatprep.subr.bf16.mxu0 0
  %1501 = vmatpush1.bf16.msra.mxu0 0
  %1502 = vmatprep.subr.bf16.mxu0 0
  %1503 = vmatpush1.bf16.msra.mxu0 0
  %1504 = vmatprep.subr.bf16.mxu0 0
  %1505 = vmatpush1.bf16.msra.mxu0 %v1486
  %1506 = vmatprep.subr.bf16.mxu0 0
  %1507 = vmatpush1.bf16.msra.mxu0 %v1485
  %1508 = vmatprep.subr.bf16.mxu0 0
  %1509 = vmatpush2.bf16.msra.mxu0 0
  %1510 = vmatprep.subr.bf16.mxu0 0
  %1511 = vmatpush2.bf16.msra.mxu0 0
  %1512 = vmatprep.subr.bf16.mxu0 0
  %1513 = vmatpush2.bf16.msra.mxu0 0
  %1514 = vmatprep.subr.bf16.mxu0 0
  %1515 = vmatpush2.bf16.msra.mxu0 0
  %1516 = vmatprep.subr.bf16.mxu0 0
  %1517 = vmatpush2.bf16.msra.mxu0 0
  %1518 = vmatprep.subr.bf16.mxu0 0
  %1519 = vmatpush2.bf16.msra.mxu0 0
  %1520 = vmatprep.subr.bf16.mxu0 0
  %1521 = vmatpush2.bf16.msra.mxu0 0
  %1522 = vmatprep.subr.bf16.mxu0 0
  %1523 = vmatpush2.bf16.msra.mxu0 0
  %1524 = vmatprep.mubr.bf16.mxu0 0
  %1525 = vmatmul.mubr.bf16.gmra.mxu0 %v1490
  %v1526 = vpop.f32.mrf.mxu0
  %v1527 = vadd.f32 %v1475, %v1526
  %v1528 = vpop.f32.mrf.mxu0
  %v1529 = vpop.f32.mrf.mxu0
  %v1530 = vadd.f32 %v1475, %v1529
  %v1531 = vpop.f32.mrf.mxu0
  %1532 = vdwg.mxu0
  %vm1533 = vcmask 7168
  %1534 = vst.msk [vmem:[%s15] sm:$0xff] %vm1533, %v1527
  %1535 = vst.msk [vmem:[%s15 + $0x8] sm:$0xff] %vm1533, %v1530
  // Predicated region
  $region62: #{bert_regression_forward.1} parent=0 // pred_check
    _
  $region63: #{bert_regression_forward.1} parent=0 // pred_check_branch
    %1537 = sbr.rel (0) target = $region65
  $region64: #{bert_regression_forward.1} parent=0 // pred_region
    _
  $region65: #{bert_regression_forward.1} parent=0 // pred_fallthru
    _
  // Predicated region
  $region66: #{bert_regression_forward.1} parent=0 // pred_check
    _
  $region67: #{bert_regression_forward.1} parent=0 // pred_check_branch
    %1539 = sbr.rel (0) target = $region69
  $region68: #{bert_regression_forward.1} parent=0 // pred_region
    _
  $region69: #{bert_regression_forward.1} parent=0 // pred_fallthru
    _

</llo_original>
